<compile_context>
chip_gen: v6e
topology: v6e:2x2x1
jax: 0.10.0
libtpu: 0.0.40
codegen_flags: <defaults>
</compile_context>

<pallas_src>
import functools

import jax
import jax.numpy as jnp
from jax.experimental import pallas as pl
from jax.experimental.pallas import tpu as pltpu

LANE = 128      # vreg lane width
SUBLANE = 8     # vreg sublane count (f32)


def _round_up(n, m):
    return ((n + m - 1) // m) * m


def _compiler_params(**kwargs):
    cls = getattr(pltpu, "CompilerParams", None)
    if cls is None:  # older jax naming
        cls = pltpu.TPUCompilerParams
    return cls(**kwargs)


# ----------------------------------------------------------------------------------
# Kernel
# ----------------------------------------------------------------------------------
def vae_forward_kernel(x_ref, eps_ref,
                       w1_ref, b1_ref,          # encoder trunk
                       wml_ref, bml_ref,        # fused mean|logvar head
                       wd1_ref, bd1_ref,        # decoder hidden (rows duplicated, see below)
                       wd2_ref, bd2_ref,        # decoder output
                       xhat_ref, ml_ref, *, off):
    wdt = w1_ref.dtype                      # bf16 (prod) or f32 (parity path)
    x = x_ref[...]

    # ---- encoder trunk: ReLU(x @ W1 + b1) ----
    h = jnp.dot(x.astype(wdt), w1_ref[...],
                preferred_element_type=jnp.float32) + b1_ref[...]
    h = jnp.maximum(h, 0.0)

    # ---- fused mean|logvar head: one lane-dense MXU pass ----
    ml = jnp.dot(h.astype(wdt), wml_ref[...],
                 preferred_element_type=jnp.float32) + bml_ref[...]
    ml_ref[...] = ml.astype(ml_ref.dtype)

    # ---- reparameterization, folded into the decoder's first matmul ----
    #   v[:, :off]       = mean (plus its zero padding)
    #   v[:, off:off+L]  = exp(0.5 * logvar) * eps   (eps was pre-shifted onto the
    #                                                 logvar lanes by the wrapper)
    # wd1_ref holds the decoder weight duplicated at rows [0:L] and [off:off+L], so
    #   v @ wd1_dup == (mean + exp(0.5*logvar) * eps) @ Wd1 == z @ Wd1   exactly.
    lane = jax.lax.broadcasted_iota(jnp.int32, ml.shape, 1)
    v = jnp.where(lane < off, ml, jnp.exp(0.5 * ml) * eps_ref[...])

    # ---- decoder ----
    d = jnp.dot(v.astype(wdt), wd1_ref[...],
                preferred_element_type=jnp.float32) + bd1_ref[...]
    d = jnp.maximum(d, 0.0)
    logits = jnp.dot(d.astype(wdt), wd2_ref[...],
                     preferred_element_type=jnp.float32) + bd2_ref[...]
    # TODO(synk): optionally emit x_hat as bf16 (or fuse BCE) to halve the writeback.
    xhat_ref[...] = jax.nn.sigmoid(logits).astype(xhat_ref.dtype)


# ----------------------------------------------------------------------------------
# One-time parameter preparation (hoisted out of the forward hot path)
# ----------------------------------------------------------------------------------
def prepare_params(params, *, weights_dtype=jnp.bfloat16):
    """Pad to lane multiples, fuse the mean|logvar head, duplicate the decoder's
    first-layer rows for the folded reparameterization, and cast matmul weights."""
    d_in, hidden = params["w1"].shape
    latent = params["wm"].shape[1]
    dp = _round_up(d_in, LANE)
    hp = _round_up(hidden, LANE)
    lp = _round_up(latent, LANE)

    packed = (2 * latent) <= LANE
    ml_w = LANE if packed else 2 * lp      # width of the mean|logvar slab
    off = latent if packed else lp         # lane offset where logvar starts

    f32 = jnp.float32
    w1 = jnp.zeros((dp, hp), f32).at[:d_in, :hidden].set(params["w1"]).astype(weights_dtype)
    b1 = jnp.zeros((1, hp), f32).at[:, :hidden].set(params["b1"].reshape(1, -1))
    wml = (jnp.zeros((hp, ml_w), f32)
           .at[:hidden, :latent].set(params["wm"])
           .at[:hidden, off:off + latent].set(params["wv"])
           .astype(weights_dtype))
    bml = (jnp.zeros((1, ml_w), f32)
           .at[:, :latent].set(params["bm"].reshape(1, -1))
           .at[:, off:off + latent].set(params["bv"].reshape(1, -1)))
    wd1 = (jnp.zeros((ml_w, hp), f32)
           .at[:latent, :hidden].set(params["wd1"])
           .at[off:off + latent, :hidden].set(params["wd1"])   # duplicated rows
           .astype(weights_dtype))
    bd1 = jnp.zeros((1, hp), f32).at[:, :hidden].set(params["bd1"].reshape(1, -1))
    wd2 = jnp.zeros((hp, dp), f32).at[:hidden, :d_in].set(params["wd2"]).astype(weights_dtype)
    bd2 = jnp.zeros((1, dp), f32).at[:, :d_in].set(params["bd2"].reshape(1, -1))

    return dict(w1=w1, b1=b1, wml=wml, bml=bml, wd1=wd1, bd1=bd1, wd2=wd2, bd2=bd2,
                d_in=d_in, hidden=hidden, latent=latent,
                dp=dp, hp=hp, ml_w=ml_w, off=off,
                weights_dtype=jnp.dtype(weights_dtype))


# ----------------------------------------------------------------------------------
# Forward wrapper
# ----------------------------------------------------------------------------------
def vae_forward(x, eps, prep, *, batch_tile=256):
    """x: (B, D_in), eps: (B, L), prep: output of prepare_params.
    Returns (x_hat, mean, logvar) un-padded."""
    B, d_in = x.shape
    L = prep["latent"]
    assert d_in == prep["d_in"] and eps.shape == (B, L)
    dp, hp, ml_w, off = prep["dp"], prep["hp"], prep["ml_w"], prep["off"]

    # ---- batch tile selection ----
    TB = min(batch_tile, _round_up(B, SUBLANE))
    if TB >= LANE:
        TB = _round_up(TB, LANE)   # keep MXU M rows full (128 works on v5e/v6e/v7x)
        # TODO(synk): round to 256 on v6e/v7x when VMEM budget allows.
    if B > SUBLANE and _round_up(B, SUBLANE) <= TB:
        # v7x has 2 TensorCores: give the "parallel" batch axis >=2 grid steps.
        TB = _round_up((B + 1) // 2, SUBLANE)
    Bp = _round_up(B, TB)
    grid = (Bp // TB,)

    # ---- activation layout plumbing (eps shifted onto the logvar lanes) ----
    xp = jnp.zeros((Bp, dp), jnp.float32).at[:B, :d_in].set(x)
    epsp = jnp.zeros((Bp, ml_w), jnp.float32).at[:B, off:off + L].set(eps)
    # TODO(synk): optional in-kernel eps via pltpu.prng_seed + stateful_normal (breaks
    # bitwise parity with torch.randn_like, so kept as an explicit input here).

    # ---- VMEM budget & cost estimate ----
    wbytes = prep["weights_dtype"].itemsize
    weight_bytes = wbytes * (dp * hp + hp * ml_w + ml_w * hp + hp * dp) \
        + 4 * (2 * hp + ml_w + dp)
    act_bytes = 4 * TB * 2 * (dp + ml_w)              # x/eps in + xhat/ml out tiles
    inter_bytes = 4 * TB * (2 * hp + 2 * ml_w + dp)   # h, ml, v, d, logits
    footprint = 2 * weight_bytes + 2 * act_bytes + inter_bytes
    cap = 64 * 1024 * 1024
    try:
        cap = pltpu.get_tpu_info().vmem_capacity_bytes
    except Exception:
        pass
    vmem_limit = int(min(int(0.8 * cap), max(32 * 1024 * 1024, 2 * footprint)))

    flops = 2 * Bp * (dp * hp + hp * ml_w + ml_w * hp + hp * dp)
    transcendentals = Bp * (ml_w + 2 * dp)            # exp (reparam) + sigmoid (exp+recip)
    bytes_accessed = weight_bytes + 4 * Bp * 2 * (dp + ml_w)

    kernel = functools.partial(vae_forward_kernel, off=off)
    out_shape = (jax.ShapeDtypeStruct((Bp, dp), jnp.float32),       # x_hat (padded)
                 jax.ShapeDtypeStruct((Bp, ml_w), jnp.float32))     # mean|logvar slab
    out_specs = (pl.BlockSpec((TB, dp), lambda i: (i, 0)),
                 pl.BlockSpec((TB, ml_w), lambda i: (i, 0)))
    weight_args = (prep["w1"], prep["b1"], prep["wml"], prep["bml"],
                   prep["wd1"], prep["bd1"], prep["wd2"], prep["bd2"])

    def run(single_buffer_weights):
        def wspec(shape):
            buffered = getattr(pl, "Buffered", None)
            if single_buffer_weights and buffered is not None:
                # Constant-index weights: stay VMEM-resident, no double buffering.
                return pl.BlockSpec(shape, lambda i: (0, 0), pipeline_mode=buffered(1))
            return pl.BlockSpec(shape, lambda i: (0, 0))

        in_specs = [
            pl.BlockSpec((TB, dp), lambda i: (i, 0)),      # x
            pl.BlockSpec((TB, ml_w), lambda i: (i, 0)),    # eps (shifted)
            wspec((dp, hp)), wspec((1, hp)),               # w1, b1
            wspec((hp, ml_w)), wspec((1, ml_w)),           # wml, bml
            wspec((ml_w, hp)), wspec((1, hp)),             # wd1 (duplicated rows), bd1
            wspec((hp, dp)), wspec((1, dp)),               # wd2, bd2
        ]
        return pl.pallas_call(
            kernel,
            out_shape=out_shape,
            grid=grid,
            in_specs=in_specs,
            out_specs=out_specs,
            compiler_params=_compiler_params(
                dimension_semantics=("parallel",),
                vmem_limit_bytes=vmem_limit),
            cost_estimate=pl.CostEstimate(
                flops=flops, transcendentals=transcendentals,
                bytes_accessed=bytes_accessed),
        )(xp, epsp, *weight_args)

    try:
        xhat_p, ml_p = run(True)
    except Exception:
        # Fallback for jax versions without BlockSpec pipeline_mode / pl.Buffered.
        xhat_p, ml_p = run(False)

    x_hat = xhat_p[:B, :d_in]
    mean = ml_p[:B, :L]
    logvar = ml_p[:B, off:off + L]
    return x_hat, mean, logvar


# ----------------------------------------------------------------------------------
# Synthetic parameters + pure-JAX reference
# ----------------------------------------------------------------------------------
def init_params(key, d_in, hidden, latent):
    ks = jax.random.split(key, 6)

    def lin(k, fan_in, fan_out):
        scale = 1.0 / jnp.sqrt(jnp.float32(fan_in))
        w = jax.random.uniform(k, (fan_in, fan_out), jnp.float32, -scale, scale)
        b = jnp.zeros((1, fan_out), jnp.float32)
        return w, b

    w1, b1 = lin(ks[0], d_in, hidden)
    wm, bm = lin(ks[1], hidden, latent)
    wv, bv = lin(ks[2], hidden, latent)
    wd1, bd1 = lin(ks[3], latent, hidden)
    wd2, bd2 = lin(ks[4], hidden, d_in)
    return dict(w1=w1, b1=b1, wm=wm, bm=bm, wv=wv, bv=bv,
                wd1=wd1, bd1=bd1, wd2=wd2, bd2=bd2)


def vae_forward_ref(x, eps, p):
    hi = jax.lax.Precision.HIGHEST
    h = jnp.maximum(jnp.dot(x, p["w1"], precision=hi) + p["b1"], 0.0)
    mean = jnp.dot(h, p["wm"], precision=hi) + p["bm"]
    logvar = jnp.dot(h, p["wv"], precision=hi) + p["bv"]
    z = mean + jnp.exp(0.5 * logvar) * eps
    d = jnp.maximum(jnp.dot(z, p["wd1"], precision=hi) + p["bd1"], 0.0)
    x_hat = jax.nn.sigmoid(jnp.dot(d, p["wd2"], precision=hi) + p["bd2"])
    return x_hat, mean, logvar


if __name__ == "__main__":
    B, D_IN, HIDDEN, LATENT = 8, 64, 32, 16

    key = jax.random.PRNGKey(0)
    k_x, k_eps, k_p, k_x2, k_eps2 = jax.random.split(key, 5)

    # Inputs in [0, 1] (consistent with the default BCELoss reconstruction target).
    x = jax.random.uniform(k_x, (B, D_IN), jnp.float32)
    eps = jax.random.normal(k_eps, (B, LATENT), jnp.float32)  # torch.randn_like(mean)
    params = init_params(k_p, D_IN, HIDDEN, LATENT)
    x_hat_r, mean_r, logvar_r = vae_forward_ref(x, eps, params)

    # ---- f32 parity path (tight tolerance against the pure-JAX reference) ----
    prep32 = prepare_params(params, weights_dtype=jnp.float32)
    x_hat, mean, logvar = vae_forward(x, eps, prep32)
    jax.block_until_ready((x_hat, mean, logvar))
    assert jnp.allclose(x_hat, x_hat_r, atol=1e-4, rtol=1e-4)
    assert jnp.allclose(mean, mean_r, atol=1e-4, rtol=1e-4)
    assert jnp.allclose(logvar, logvar_r, atol=1e-4, rtol=1e-4)

    # ---- bf16 production path (MXU-native weights), loosened tolerance ----
    prep16 = prepare_params(params)  # bf16 weights by default
    x_hat_b, mean_b, logvar_b = vae_forward(x, eps, prep16)
    jax.block_until_ready((x_hat_b, mean_b, logvar_b))
    assert jnp.allclose(x_hat_b, x_hat_r, atol=5e-2, rtol=5e-2)
    assert jnp.allclose(mean_b, mean_r, atol=5e-2, rtol=5e-2)
    assert jnp.allclose(logvar_b, logvar_r, atol=5e-2, rtol=5e-2)

    # ---- multi-step grid paths (weights resident across steps) ----
    B2 = 24
    x2 = jax.random.uniform(k_x2, (B2, D_IN), jnp.float32)
    eps2 = jax.random.normal(k_eps2, (B2, LATENT), jnp.float32)
    x_hat2_r, mean2_r, logvar2_r = vae_forward_ref(x2, eps2, params)

    x_hat2, mean2, logvar2 = vae_forward(x2, eps2, prep32)                 # 2-step split
    x_hat3, mean3, logvar3 = vae_forward(x2, eps2, prep32, batch_tile=8)   # 3-step grid
    jax.block_until_ready((x_hat2, x_hat3))
    for xh, mn, lv in ((x_hat2, mean2, logvar2), (x_hat3, mean3, logvar3)):
        assert jnp.allclose(xh, x_hat2_r, atol=1e-4, rtol=1e-4)
        assert jnp.allclose(mn, mean2_r, atol=1e-4, rtol=1e-4)
        assert jnp.allclose(lv, logvar2_r, atol=1e-4, rtol=1e-4)

    print("KERNEL_OK")
</pallas_src>

<mosaic_0001>
module attributes {stable_mosaic.version = 11 : i64} {
  func.func @vae_forward_kernel(%arg0: i32, %arg1: memref<8x128xf32, #tpu.memory_space<vmem>>, %arg2: memref<8x128xf32, #tpu.memory_space<vmem>>, %arg3: memref<128x128xf32, #tpu.memory_space<vmem>>, %arg4: memref<1x128xf32, #tpu.memory_space<vmem>>, %arg5: memref<128x128xf32, #tpu.memory_space<vmem>>, %arg6: memref<1x128xf32, #tpu.memory_space<vmem>>, %arg7: memref<128x128xf32, #tpu.memory_space<vmem>>, %arg8: memref<1x128xf32, #tpu.memory_space<vmem>>, %arg9: memref<128x128xf32, #tpu.memory_space<vmem>>, %arg10: memref<1x128xf32, #tpu.memory_space<vmem>>, %arg11: memref<8x128xf32, #tpu.memory_space<vmem>>, %arg12: memref<8x128xf32, #tpu.memory_space<vmem>>) attributes {dimension_semantics = [#tpu.dimension_semantics<parallel>], iteration_bounds = array<i64: 1>, scalar_prefetch = 0 : i64, scratch_operands = 0 : i64, tpu.core_type = #tpu.core_type<tc>, window_params = [{transform_indices = @transform_0, window_bounds = array<i64: 8, 128>}, {transform_indices = @transform_1, window_bounds = array<i64: 8, 128>}, {pipeline_mode = #tpu.pipeline_mode<synchronous>, transform_indices = @transform_2, window_bounds = array<i64: 128, 128>}, {pipeline_mode = #tpu.pipeline_mode<synchronous>, transform_indices = @transform_3, window_bounds = array<i64: 1, 128>}, {pipeline_mode = #tpu.pipeline_mode<synchronous>, transform_indices = @transform_4, window_bounds = array<i64: 128, 128>}, {pipeline_mode = #tpu.pipeline_mode<synchronous>, transform_indices = @transform_5, window_bounds = array<i64: 1, 128>}, {pipeline_mode = #tpu.pipeline_mode<synchronous>, transform_indices = @transform_6, window_bounds = array<i64: 128, 128>}, {pipeline_mode = #tpu.pipeline_mode<synchronous>, transform_indices = @transform_7, window_bounds = array<i64: 1, 128>}, {pipeline_mode = #tpu.pipeline_mode<synchronous>, transform_indices = @transform_8, window_bounds = array<i64: 128, 128>}, {pipeline_mode = #tpu.pipeline_mode<synchronous>, transform_indices = @transform_9, window_bounds = array<i64: 1, 128>}, {transform_indices = @transform_10, window_bounds = array<i64: 8, 128>}, {transform_indices = @transform_11, window_bounds = array<i64: 8, 128>}]} {
    %c0 = arith.constant 0 : index
    %c0_0 = arith.constant 0 : index
    %0 = vector.load %arg1[%c0, %c0_0] : memref<8x128xf32, #tpu.memory_space<vmem>>, vector<8x128xf32>
    %c0_1 = arith.constant 0 : index
    %c0_2 = arith.constant 0 : index
    %1 = vector.load %arg3[%c0_1, %c0_2] : memref<128x128xf32, #tpu.memory_space<vmem>>, vector<128x128xf32>
    %cst = arith.constant dense<0.000000e+00> : vector<8x128xf32>
    %2 = tpu.matmul %0, %1, %cst {dimension_numbers = #tpu.dot_dimension_numbers<[1], [0], [0], [1], [0, 0, 1, 1], [], []>} : vector<8x128xf32>, vector<128x128xf32>, vector<8x128xf32> -> vector<8x128xf32>
    %c0_3 = arith.constant 0 : index
    %c0_4 = arith.constant 0 : index
    %3 = vector.load %arg4[%c0_3, %c0_4] : memref<1x128xf32, #tpu.memory_space<vmem>>, vector<1x128xf32>
    %4 = vector.broadcast %3 : vector<1x128xf32> to vector<8x128xf32>
    %5 = arith.addf %2, %4 : vector<8x128xf32>
    %cst_5 = arith.constant 0.000000e+00 : f32
    %6 = vector.broadcast %cst_5 : f32 to vector<8x128xf32>
    %7 = arith.maximumf %5, %6 : vector<8x128xf32>
    %c0_6 = arith.constant 0 : index
    %c0_7 = arith.constant 0 : index
    %8 = vector.load %arg5[%c0_6, %c0_7] : memref<128x128xf32, #tpu.memory_space<vmem>>, vector<128x128xf32>
    %cst_8 = arith.constant dense<0.000000e+00> : vector<8x128xf32>
    %9 = tpu.matmul %7, %8, %cst_8 {dimension_numbers = #tpu.dot_dimension_numbers<[1], [0], [0], [1], [0, 0, 1, 1], [], []>} : vector<8x128xf32>, vector<128x128xf32>, vector<8x128xf32> -> vector<8x128xf32>
    %c0_9 = arith.constant 0 : index
    %c0_10 = arith.constant 0 : index
    %10 = vector.load %arg6[%c0_9, %c0_10] : memref<1x128xf32, #tpu.memory_space<vmem>>, vector<1x128xf32>
    %11 = vector.broadcast %10 : vector<1x128xf32> to vector<8x128xf32>
    %12 = arith.addf %9, %11 : vector<8x128xf32>
    %c0_11 = arith.constant 0 : index
    %c0_12 = arith.constant 0 : index
    %13 = vector.load %arg12[%c0_11, %c0_12] : memref<8x128xf32, #tpu.memory_space<vmem>>, vector<8x128xf32>
    tpu.vector_store %arg12[%c0_11, %c0_12], %12 {strides = array<i32>} : memref<8x128xf32, #tpu.memory_space<vmem>>, vector<8x128xf32>,
    %14 = tpu.iota {dimensions = array<i32: 1>} : vector<8x128xi32>
    %c16_i32 = arith.constant 16 : i32
    %15 = vector.broadcast %c16_i32 : i32 to vector<8x128xi32>
    %16 = arith.cmpi slt, %14, %15 : vector<8x128xi32>
    %cst_13 = arith.constant 5.000000e-01 : f32
    %17 = vector.broadcast %cst_13 : f32 to vector<8x128xf32>
    %18 = arith.mulf %17, %12 : vector<8x128xf32>
    %19 = math.exp %18 : vector<8x128xf32>
    %c0_14 = arith.constant 0 : index
    %c0_15 = arith.constant 0 : index
    %20 = vector.load %arg2[%c0_14, %c0_15] : memref<8x128xf32, #tpu.memory_space<vmem>>, vector<8x128xf32>
    %21 = arith.mulf %19, %20 : vector<8x128xf32>
    %22 = arith.select %16, %12, %21 : vector<8x128xi1>, vector<8x128xf32>
    %c0_16 = arith.constant 0 : index
    %c0_17 = arith.constant 0 : index
    %23 = vector.load %arg7[%c0_16, %c0_17] : memref<128x128xf32, #tpu.memory_space<vmem>>, vector<128x128xf32>
    %cst_18 = arith.constant dense<0.000000e+00> : vector<8x128xf32>
    %24 = tpu.matmul %22, %23, %cst_18 {dimension_numbers = #tpu.dot_dimension_numbers<[1], [0], [0], [1], [0, 0, 1, 1], [], []>} : vector<8x128xf32>, vector<128x128xf32>, vector<8x128xf32> -> vector<8x128xf32>
    %c0_19 = arith.constant 0 : index
    %c0_20 = arith.constant 0 : index
    %25 = vector.load %arg8[%c0_19, %c0_20] : memref<1x128xf32, #tpu.memory_space<vmem>>, vector<1x128xf32>
    %26 = vector.broadcast %25 : vector<1x128xf32> to vector<8x128xf32>
    %27 = arith.addf %24, %26 : vector<8x128xf32>
    %cst_21 = arith.constant 0.000000e+00 : f32
    %28 = vector.broadcast %cst_21 : f32 to vector<8x128xf32>
    %29 = arith.maximumf %27, %28 : vector<8x128xf32>
    %c0_22 = arith.constant 0 : index
    %c0_23 = arith.constant 0 : index
    %30 = vector.load %arg9[%c0_22, %c0_23] : memref<128x128xf32, #tpu.memory_space<vmem>>, vector<128x128xf32>
    %cst_24 = arith.constant dense<0.000000e+00> : vector<8x128xf32>
    %31 = tpu.matmul %29, %30, %cst_24 {dimension_numbers = #tpu.dot_dimension_numbers<[1], [0], [0], [1], [0, 0, 1, 1], [], []>} : vector<8x128xf32>, vector<128x128xf32>, vector<8x128xf32> -> vector<8x128xf32>
    %c0_25 = arith.constant 0 : index
    %c0_26 = arith.constant 0 : index
    %32 = vector.load %arg10[%c0_25, %c0_26] : memref<1x128xf32, #tpu.memory_space<vmem>>, vector<1x128xf32>
    %33 = vector.broadcast %32 : vector<1x128xf32> to vector<8x128xf32>
    %34 = arith.addf %31, %33 : vector<8x128xf32>
    %35 = arith.negf %34 : vector<8x128xf32>
    %36 = math.exp %35 : vector<8x128xf32>
    %cst_27 = arith.constant 1.000000e+00 : f32
    %37 = vector.broadcast %cst_27 : f32 to vector<8x128xf32>
    %38 = arith.addf %37, %36 : vector<8x128xf32>
    %39 = arith.divf %37, %38 : vector<8x128xf32>
    %c0_28 = arith.constant 0 : index
    %c0_29 = arith.constant 0 : index
    %40 = vector.load %arg11[%c0_28, %c0_29] : memref<8x128xf32, #tpu.memory_space<vmem>>, vector<8x128xf32>
    tpu.vector_store %arg11[%c0_28, %c0_29], %39 {strides = array<i32>} : memref<8x128xf32, #tpu.memory_space<vmem>>, vector<8x128xf32>,
    return
  }
  func.func @transform_0(%arg0: i32) -> (i32, i32) {
    %c0_i32 = arith.constant 0 : i32
    %c0_i32_0 = arith.constant 0 : i32
    return %arg0, %c0_i32 : i32, i32
  }
  func.func @transform_1(%arg0: i32) -> (i32, i32) {
    %c0_i32 = arith.constant 0 : i32
    %c0_i32_0 = arith.constant 0 : i32
    return %arg0, %c0_i32 : i32, i32
  }
  func.func @transform_2(%arg0: i32) -> (i32, i32) {
    %c0_i32 = arith.constant 0 : i32
    %c0_i32_0 = arith.constant 0 : i32
    %c0_i32_1 = arith.constant 0 : i32
    return %c0_i32, %c0_i32_0 : i32, i32
  }
  func.func @transform_3(%arg0: i32) -> (i32, i32) {
    %c0_i32 = arith.constant 0 : i32
    %c0_i32_0 = arith.constant 0 : i32
    %c0_i32_1 = arith.constant 0 : i32
    return %c0_i32, %c0_i32_0 : i32, i32
  }
  func.func @transform_4(%arg0: i32) -> (i32, i32) {
    %c0_i32 = arith.constant 0 : i32
    %c0_i32_0 = arith.constant 0 : i32
    %c0_i32_1 = arith.constant 0 : i32
    return %c0_i32, %c0_i32_0 : i32, i32
  }
  func.func @transform_5(%arg0: i32) -> (i32, i32) {
    %c0_i32 = arith.constant 0 : i32
    %c0_i32_0 = arith.constant 0 : i32
    %c0_i32_1 = arith.constant 0 : i32
    return %c0_i32, %c0_i32_0 : i32, i32
  }
  func.func @transform_6(%arg0: i32) -> (i32, i32) {
    %c0_i32 = arith.constant 0 : i32
    %c0_i32_0 = arith.constant 0 : i32
    %c0_i32_1 = arith.constant 0 : i32
    return %c0_i32, %c0_i32_0 : i32, i32
  }
  func.func @transform_7(%arg0: i32) -> (i32, i32) {
    %c0_i32 = arith.constant 0 : i32
    %c0_i32_0 = arith.constant 0 : i32
    %c0_i32_1 = arith.constant 0 : i32
    return %c0_i32, %c0_i32_0 : i32, i32
  }
  func.func @transform_8(%arg0: i32) -> (i32, i32) {
    %c0_i32 = arith.constant 0 : i32
    %c0_i32_0 = arith.constant 0 : i32
    %c0_i32_1 = arith.constant 0 : i32
    return %c0_i32, %c0_i32_0 : i32, i32
  }
  func.func @transform_9(%arg0: i32) -> (i32, i32) {
    %c0_i32 = arith.constant 0 : i32
    %c0_i32_0 = arith.constant 0 : i32
    %c0_i32_1 = arith.constant 0 : i32
    return %c0_i32, %c0_i32_0 : i32, i32
  }
  func.func @transform_10(%arg0: i32) -> (i32, i32) {
    %c0_i32 = arith.constant 0 : i32
    %c0_i32_0 = arith.constant 0 : i32
    return %arg0, %c0_i32 : i32, i32
  }
  func.func @transform_11(%arg0: i32) -> (i32, i32) {
    %c0_i32 = arith.constant 0 : i32
    %c0_i32_0 = arith.constant 0 : i32
    return %arg0, %c0_i32 : i32, i32
  }
}

module attributes {stable_mosaic.version = 11 : i64} {
  func.func @vae_forward_kernel(%arg0: i32, %arg1: memref<8x128xf32, #tpu.memory_space<vmem>>, %arg2: memref<8x128xf32, #tpu.memory_space<vmem>>, %arg3: memref<128x128xf32, #tpu.memory_space<vmem>>, %arg4: memref<1x128xf32, #tpu.memory_space<vmem>>, %arg5: memref<128x128xf32, #tpu.memory_space<vmem>>, %arg6: memref<1x128xf32, #tpu.memory_space<vmem>>, %arg7: memref<128x128xf32, #tpu.memory_space<vmem>>, %arg8: memref<1x128xf32, #tpu.memory_space<vmem>>, %arg9: memref<128x128xf32, #tpu.memory_space<vmem>>, %arg10: memref<1x128xf32, #tpu.memory_space<vmem>>, %arg11: memref<8x128xf32, #tpu.memory_space<vmem>>, %arg12: memref<8x128xf32, #tpu.memory_space<vmem>>) attributes {dimension_semantics = [#tpu.dimension_semantics<parallel>], iteration_bounds = array<i64: 1>, scalar_prefetch = 0 : i64, scratch_operands = 0 : i64, tpu.core_type = #tpu.core_type<tc>, window_params = [{transform_indices = @transform_0, window_bounds = array<i64: 8, 128>}, {transform_indices = @transform_1, window_bounds = array<i64: 8, 128>}, {pipeline_mode = #tpu.pipeline_mode<synchronous>, transform_indices = @transform_2, window_bounds = array<i64: 128, 128>}, {pipeline_mode = #tpu.pipeline_mode<synchronous>, transform_indices = @transform_3, window_bounds = array<i64: 1, 128>}, {pipeline_mode = #tpu.pipeline_mode<synchronous>, transform_indices = @transform_4, window_bounds = array<i64: 128, 128>}, {pipeline_mode = #tpu.pipeline_mode<synchronous>, transform_indices = @transform_5, window_bounds = array<i64: 1, 128>}, {pipeline_mode = #tpu.pipeline_mode<synchronous>, transform_indices = @transform_6, window_bounds = array<i64: 128, 128>}, {pipeline_mode = #tpu.pipeline_mode<synchronous>, transform_indices = @transform_7, window_bounds = array<i64: 1, 128>}, {pipeline_mode = #tpu.pipeline_mode<synchronous>, transform_indices = @transform_8, window_bounds = array<i64: 128, 128>}, {pipeline_mode = #tpu.pipeline_mode<synchronous>, transform_indices = @transform_9, window_bounds = array<i64: 1, 128>}, {transform_indices = @transform_10, window_bounds = array<i64: 8, 128>}, {transform_indices = @transform_11, window_bounds = array<i64: 8, 128>}]} {
    %c0 = arith.constant 0 : index
    %c0_0 = arith.constant 0 : index
    %0 = vector.load %arg1[%c0, %c0_0] : memref<8x128xf32, #tpu.memory_space<vmem>>, vector<8x128xf32>
    %c0_1 = arith.constant 0 : index
    %c0_2 = arith.constant 0 : index
    %1 = vector.load %arg3[%c0_1, %c0_2] : memref<128x128xf32, #tpu.memory_space<vmem>>, vector<128x128xf32>
    %cst = arith.constant dense<0.000000e+00> : vector<8x128xf32>
    %2 = tpu.matmul %0, %1, %cst {dimension_numbers = #tpu.dot_dimension_numbers<[1], [0], [0], [1], [0, 0, 1, 1], [], []>} : vector<8x128xf32>, vector<128x128xf32>, vector<8x128xf32> -> vector<8x128xf32>
    %c0_3 = arith.constant 0 : index
    %c0_4 = arith.constant 0 : index
    %3 = vector.load %arg4[%c0_3, %c0_4] : memref<1x128xf32, #tpu.memory_space<vmem>>, vector<1x128xf32>
    %4 = vector.broadcast %3 : vector<1x128xf32> to vector<8x128xf32>
    %5 = arith.addf %2, %4 : vector<8x128xf32>
    %cst_5 = arith.constant 0.000000e+00 : f32
    %6 = vector.broadcast %cst_5 : f32 to vector<8x128xf32>
    %7 = arith.maximumf %5, %6 : vector<8x128xf32>
    %c0_6 = arith.constant 0 : index
    %c0_7 = arith.constant 0 : index
    %8 = vector.load %arg5[%c0_6, %c0_7] : memref<128x128xf32, #tpu.memory_space<vmem>>, vector<128x128xf32>
    %cst_8 = arith.constant dense<0.000000e+00> : vector<8x128xf32>
    %9 = tpu.matmul %7, %8, %cst_8 {dimension_numbers = #tpu.dot_dimension_numbers<[1], [0], [0], [1], [0, 0, 1, 1], [], []>} : vector<8x128xf32>, vector<128x128xf32>, vector<8x128xf32> -> vector<8x128xf32>
    %c0_9 = arith.constant 0 : index
    %c0_10 = arith.constant 0 : index
    %10 = vector.load %arg6[%c0_9, %c0_10] : memref<1x128xf32, #tpu.memory_space<vmem>>, vector<1x128xf32>
    %11 = vector.broadcast %10 : vector<1x128xf32> to vector<8x128xf32>
    %12 = arith.addf %9, %11 : vector<8x128xf32>
    %c0_11 = arith.constant 0 : index
    %c0_12 = arith.constant 0 : index
    %13 = vector.load %arg12[%c0_11, %c0_12] : memref<8x128xf32, #tpu.memory_space<vmem>>, vector<8x128xf32>
    tpu.vector_store %arg12[%c0_11, %c0_12], %12 {strides = array<i32>} : memref<8x128xf32, #tpu.memory_space<vmem>>, vector<8x128xf32>,
    %14 = tpu.iota {dimensions = array<i32: 1>} : vector<8x128xi32>
    %c16_i32 = arith.constant 16 : i32
    %15 = vector.broadcast %c16_i32 : i32 to vector<8x128xi32>
    %16 = arith.cmpi slt, %14, %15 : vector<8x128xi32>
    %cst_13 = arith.constant 5.000000e-01 : f32
    %17 = vector.broadcast %cst_13 : f32 to vector<8x128xf32>
    %18 = arith.mulf %17, %12 : vector<8x128xf32>
    %19 = math.exp %18 : vector<8x128xf32>
    %c0_14 = arith.constant 0 : index
    %c0_15 = arith.constant 0 : index
    %20 = vector.load %arg2[%c0_14, %c0_15] : memref<8x128xf32, #tpu.memory_space<vmem>>, vector<8x128xf32>
    %21 = arith.mulf %19, %20 : vector<8x128xf32>
    %22 = arith.select %16, %12, %21 : vector<8x128xi1>, vector<8x128xf32>
    %c0_16 = arith.constant 0 : index
    %c0_17 = arith.constant 0 : index
    %23 = vector.load %arg7[%c0_16, %c0_17] : memref<128x128xf32, #tpu.memory_space<vmem>>, vector<128x128xf32>
    %cst_18 = arith.constant dense<0.000000e+00> : vector<8x128xf32>
    %24 = tpu.matmul %22, %23, %cst_18 {dimension_numbers = #tpu.dot_dimension_numbers<[1], [0], [0], [1], [0, 0, 1, 1], [], []>} : vector<8x128xf32>, vector<128x128xf32>, vector<8x128xf32> -> vector<8x128xf32>
    %c0_19 = arith.constant 0 : index
    %c0_20 = arith.constant 0 : index
    %25 = vector.load %arg8[%c0_19, %c0_20] : memref<1x128xf32, #tpu.memory_space<vmem>>, vector<1x128xf32>
    %26 = vector.broadcast %25 : vector<1x128xf32> to vector<8x128xf32>
    %27 = arith.addf %24, %26 : vector<8x128xf32>
    %cst_21 = arith.constant 0.000000e+00 : f32
    %28 = vector.broadcast %cst_21 : f32 to vector<8x128xf32>
    %29 = arith.maximumf %27, %28 : vector<8x128xf32>
    %c0_22 = arith.constant 0 : index
    %c0_23 = arith.constant 0 : index
    %30 = vector.load %arg9[%c0_22, %c0_23] : memref<128x128xf32, #tpu.memory_space<vmem>>, vector<128x128xf32>
    %cst_24 = arith.constant dense<0.000000e+00> : vector<8x128xf32>
    %31 = tpu.matmul %29, %30, %cst_24 {dimension_numbers = #tpu.dot_dimension_numbers<[1], [0], [0], [1], [0, 0, 1, 1], [], []>} : vector<8x128xf32>, vector<128x128xf32>, vector<8x128xf32> -> vector<8x128xf32>
    %c0_25 = arith.constant 0 : index
    %c0_26 = arith.constant 0 : index
    %32 = vector.load %arg10[%c0_25, %c0_26] : memref<1x128xf32, #tpu.memory_space<vmem>>, vector<1x128xf32>
    %33 = vector.broadcast %32 : vector<1x128xf32> to vector<8x128xf32>
    %34 = arith.addf %31, %33 : vector<8x128xf32>
    %35 = arith.negf %34 : vector<8x128xf32>
    %36 = math.exp %35 : vector<8x128xf32>
    %cst_27 = arith.constant 1.000000e+00 : f32
    %37 = vector.broadcast %cst_27 : f32 to vector<8x128xf32>
    %38 = arith.addf %37, %36 : vector<8x128xf32>
    %39 = arith.divf %37, %38 : vector<8x128xf32>
    %c0_28 = arith.constant 0 : index
    %c0_29 = arith.constant 0 : index
    %40 = vector.load %arg11[%c0_28, %c0_29] : memref<8x128xf32, #tpu.memory_space<vmem>>, vector<8x128xf32>
    tpu.vector_store %arg11[%c0_28, %c0_29], %39 {strides = array<i32>} : memref<8x128xf32, #tpu.memory_space<vmem>>, vector<8x128xf32>,
    return
  }
  func.func @transform_0(%arg0: i32) -> (i32, i32) {
    %c0_i32 = arith.constant 0 : i32
    %c0_i32_0 = arith.constant 0 : i32
    return %arg0, %c0_i32 : i32, i32
  }
  func.func @transform_1(%arg0: i32) -> (i32, i32) {
    %c0_i32 = arith.constant 0 : i32
    %c0_i32_0 = arith.constant 0 : i32
    return %arg0, %c0_i32 : i32, i32
  }
  func.func @transform_2(%arg0: i32) -> (i32, i32) {
    %c0_i32 = arith.constant 0 : i32
    %c0_i32_0 = arith.constant 0 : i32
    %c0_i32_1 = arith.constant 0 : i32
    return %c0_i32, %c0_i32_0 : i32, i32
  }
  func.func @transform_3(%arg0: i32) -> (i32, i32) {
    %c0_i32 = arith.constant 0 : i32
    %c0_i32_0 = arith.constant 0 : i32
    %c0_i32_1 = arith.constant 0 : i32
    return %c0_i32, %c0_i32_0 : i32, i32
  }
  func.func @transform_4(%arg0: i32) -> (i32, i32) {
    %c0_i32 = arith.constant 0 : i32
    %c0_i32_0 = arith.constant 0 : i32
    %c0_i32_1 = arith.constant 0 : i32
    return %c0_i32, %c0_i32_0 : i32, i32
  }
  func.func @transform_5(%arg0: i32) -> (i32, i32) {
    %c0_i32 = arith.constant 0 : i32
    %c0_i32_0 = arith.constant 0 : i32
    %c0_i32_1 = arith.constant 0 : i32
    return %c0_i32, %c0_i32_0 : i32, i32
  }
  func.func @transform_6(%arg0: i32) -> (i32, i32) {
    %c0_i32 = arith.constant 0 : i32
    %c0_i32_0 = arith.constant 0 : i32
    %c0_i32_1 = arith.constant 0 : i32
    return %c0_i32, %c0_i32_0 : i32, i32
  }
  func.func @transform_7(%arg0: i32) -> (i32, i32) {
    %c0_i32 = arith.constant 0 : i32
    %c0_i32_0 = arith.constant 0 : i32
    %c0_i32_1 = arith.constant 0 : i32
    return %c0_i32, %c0_i32_0 : i32, i32
  }
  func.func @transform_8(%arg0: i32) -> (i32, i32) {
    %c0_i32 = arith.constant 0 : i32
    %c0_i32_0 = arith.constant 0 : i32
    %c0_i32_1 = arith.constant 0 : i32
    return %c0_i32, %c0_i32_0 : i32, i32
  }
  func.func @transform_9(%arg0: i32) -> (i32, i32) {
    %c0_i32 = arith.constant 0 : i32
    %c0_i32_0 = arith.constant 0 : i32
    %c0_i32_1 = arith.constant 0 : i32
    return %c0_i32, %c0_i32_0 : i32, i32
  }
  func.func @transform_10(%arg0: i32) -> (i32, i32) {
    %c0_i32 = arith.constant 0 : i32
    %c0_i32_0 = arith.constant 0 : i32
    return %arg0, %c0_i32 : i32, i32
  }
  func.func @transform_11(%arg0: i32) -> (i32, i32) {
    %c0_i32 = arith.constant 0 : i32
    %c0_i32_0 = arith.constant 0 : i32
    return %arg0, %c0_i32 : i32, i32
  }
}

</mosaic_0001>

<llo_original>
// kernel: tpu_custom_call.1
$region0: #{tpu_custom_call.1}
  #allocation0 [shape = 'u32[]', space=smem, size = 0x4, offset = 0x4, fixed_abs, tag = 'smem constant byte address 0x4 - core index']
  #allocation1 [shape = 'u32[144,128]{1,0:T(1,128)}', space=vmem, size = 0x12000, scoped, tag = 'internal scratch']
  %s0 = inlined_call_operand.hbm [shape: f32[8,128], index: 0, kind: input, shape index: {}]
  %s1 = inlined_call_operand.hbm [shape: f32[8,128], index: 1, kind: input, shape index: {}]
  %s2 = inlined_call_operand.hbm [shape: f32[128,128], index: 2, kind: input, shape index: {}]
  %s3 = inlined_call_operand.vmem [shape: f32[1,128], index: 3, kind: input, shape index: {}]
  %s4 = inlined_call_operand.hbm [shape: f32[128,128], index: 4, kind: input, shape index: {}]
  %s5 = inlined_call_operand.vmem [shape: f32[1,128], index: 5, kind: input, shape index: {}]
  %s6 = inlined_call_operand.hbm [shape: f32[128,128], index: 6, kind: input, shape index: {}]
  %s7 = inlined_call_operand.vmem [shape: f32[1,128], index: 7, kind: input, shape index: {}]
  %s8 = inlined_call_operand.hbm [shape: f32[128,128], index: 8, kind: input, shape index: {}]
  %s9 = inlined_call_operand.vmem [shape: f32[1,128], index: 9, kind: input, shape index: {}]
  %s10 = inlined_call_operand.hbm [shape: f32[8,128], index: 10, kind: output, shape index: {0}]
  %s11 = inlined_call_operand.hbm [shape: f32[8,128], index: 11, kind: output, shape index: {1}]
  %12 = xla_tuple %s10, %s11
  %s13 = sld [smem:[#allocation0]]
  $region82: #{tpu_custom_call.1} parent=0
    _
  %s15 = ssub.s32 1, %s13
  %s16 = scalar_select 0, %s15, %s13
  $region1: #{tpu_custom_call.1} parent=0
    #allocation2 [shape = 'u8[4096]{0}', space=vmem, size = 0x1000, scoped, tag = 'input window, operand 0, single buffered']
    #allocation3 [shape = 's32[1]{0}', space=sflag, size = 0x4, scoped, tag = 'scoped memory for tpu_custom_call.1']
    #allocation4 [shape = 's32[1]{0}', space=sflag, size = 0x4, scoped, tag = 'scoped memory for tpu_custom_call.1']
    #allocation5 [shape = 'u8[4096]{0}', space=vmem, size = 0x1000, scoped, tag = 'input window, operand 1, single buffered']
    #allocation6 [shape = 's32[1]{0}', space=sflag, size = 0x4, scoped, tag = 'scoped memory for tpu_custom_call.1']
    #allocation7 [shape = 'u8[65536]{0}', space=vmem, size = 0x10000, scoped, tag = 'input window, operand 2, single buffered']
    #allocation8 [shape = 'u8[65536]{0}', space=vmem, size = 0x10000, scoped, tag = 'input window, operand 4, single buffered']
    #allocation9 [shape = 's32[1]{0}', space=sflag, size = 0x4, scoped, tag = 'scoped memory for tpu_custom_call.1']
    #allocation10 [shape = 'u8[65536]{0}', space=vmem, size = 0x10000, scoped, tag = 'input window, operand 6, single buffered']
    #allocation11 [shape = 'u8[65536]{0}', space=vmem, size = 0x10000, scoped, tag = 'input window, operand 8, single buffered']
    #allocation12 [shape = 's32[1]{0}', space=sflag, size = 0x4, scoped, tag = 'scoped memory for tpu_custom_call.1']
    #allocation13 [shape = 'u8[4096]{0}', space=vmem, size = 0x1000, scoped, tag = 'output window, operand 0, single buffered']
    #allocation14 [shape = 'u8[4096]{0}', space=vmem, size = 0x1000, scoped, tag = 'output window, operand 1, single buffered']
    #allocation15 [shape = 's32[1]{0}', space=sflag, size = 0x4, scoped, tag = 'scoped memory for tpu_custom_call.1']
    %17 = vsyncpa [#allocation3], 0
    %18 = vsyncpa [#allocation6], 0
    %19 = vsyncpa [#allocation9], 0
    %20 = vsyncpa [#allocation12], 0
    %21 = vsyncpa [#allocation4], 0
    %22 = vsyncpa [#allocation15], 0
    // Predicated region
    $region2: #{tpu_custom_call.1} parent=1 // pred_check
      _
    $region3: #{tpu_custom_call.1} parent=1 // pred_check_branch
      %24 = sbr.rel (0) target = $region5
    $region4: #{tpu_custom_call.1} parent=1 // pred_region
      %s26 = ssub.s32 128, 128
      %27 = vsyncadd [#allocation3], %s26
      %s29 = sshll.u32 [#allocation2], 4
      %s30 = int_to_ptr.vmem [resolvable:$true] %s29
      %32 = dma.hbm_to_vmem [thread:$0]  %s0, 128, %s30, [#allocation3]
    $region5: #{tpu_custom_call.1} parent=1 // pred_fallthru
      _
    // Predicated region
    $region6: #{tpu_custom_call.1} parent=1 // pred_check
      _
    $region7: #{tpu_custom_call.1} parent=1 // pred_check_branch
      %34 = sbr.rel (0) target = $region9
    $region8: #{tpu_custom_call.1} parent=1 // pred_region
      %s36 = ssub.s32 128, 128
      %37 = vsyncadd [#allocation6], %s36
      %s39 = sshll.u32 [#allocation5], 4
      %s40 = int_to_ptr.vmem [resolvable:$true] %s39
      %42 = dma.hbm_to_vmem [thread:$0]  %s1, 128, %s40, [#allocation6]
    $region9: #{tpu_custom_call.1} parent=1 // pred_fallthru
      _
    // Predicated region
    $region10: #{tpu_custom_call.1} parent=1 // pred_check
      _
    $region11: #{tpu_custom_call.1} parent=1 // pred_check_branch
      %44 = sbr.rel (0) target = $region13
    $region12: #{tpu_custom_call.1} parent=1 // pred_region
      %s46 = ssub.s32 2048, 2048
      %47 = vsyncadd [#allocation6], %s46
      %s48 = sshll.u32 [#allocation7], 4
      %s49 = int_to_ptr.vmem [resolvable:$true] %s48
      %54 = dma.hbm_to_vmem [thread:$0]  %s2, 2048, %s49, [#allocation6], 128, 128, 8
    $region13: #{tpu_custom_call.1} parent=1 // pred_fallthru
      _
    // Predicated region
    $region14: #{tpu_custom_call.1} parent=1 // pred_check
      _
    $region15: #{tpu_custom_call.1} parent=1 // pred_check_branch
      %56 = sbr.rel (0) target = $region17
    $region16: #{tpu_custom_call.1} parent=1 // pred_region
      _
    $region17: #{tpu_custom_call.1} parent=1 // pred_fallthru
      _
    // Predicated region
    $region18: #{tpu_custom_call.1} parent=1 // pred_check
      _
    $region19: #{tpu_custom_call.1} parent=1 // pred_check_branch
      %58 = sbr.rel (0) target = $region21
    $region20: #{tpu_custom_call.1} parent=1 // pred_region
      %s60 = ssub.s32 2048, 2048
      %61 = vsyncadd [#allocation9], %s60
      %s62 = sshll.u32 [#allocation8], 4
      %s63 = int_to_ptr.vmem [resolvable:$true] %s62
      %68 = dma.hbm_to_vmem [thread:$0]  %s4, 2048, %s63, [#allocation9], 128, 128, 8
    $region21: #{tpu_custom_call.1} parent=1 // pred_fallthru
      _
    // Predicated region
    $region22: #{tpu_custom_call.1} parent=1 // pred_check
      _
    $region23: #{tpu_custom_call.1} parent=1 // pred_check_branch
      %70 = sbr.rel (0) target = $region25
    $region24: #{tpu_custom_call.1} parent=1 // pred_region
      _
    $region25: #{tpu_custom_call.1} parent=1 // pred_fallthru
      _
    // Predicated region
    $region26: #{tpu_custom_call.1} parent=1 // pred_check
      _
    $region27: #{tpu_custom_call.1} parent=1 // pred_check_branch
      %72 = sbr.rel (0) target = $region29
    $region28: #{tpu_custom_call.1} parent=1 // pred_region
      %s74 = ssub.s32 2048, 2048
      %75 = vsyncadd [#allocation9], %s74
      %s76 = sshll.u32 [#allocation10], 4
      %s77 = int_to_ptr.vmem [resolvable:$true] %s76
      %82 = dma.hbm_to_vmem [thread:$0]  %s6, 2048, %s77, [#allocation9], 128, 128, 8
    $region29: #{tpu_custom_call.1} parent=1 // pred_fallthru
      _
    // Predicated region
    $region30: #{tpu_custom_call.1} parent=1 // pred_check
      _
    $region31: #{tpu_custom_call.1} parent=1 // pred_check_branch
      %84 = sbr.rel (0) target = $region33
    $region32: #{tpu_custom_call.1} parent=1 // pred_region
      _
    $region33: #{tpu_custom_call.1} parent=1 // pred_fallthru
      _
    // Predicated region
    $region34: #{tpu_custom_call.1} parent=1 // pred_check
      _
    $region35: #{tpu_custom_call.1} parent=1 // pred_check_branch
      %86 = sbr.rel (0) target = $region37
    $region36: #{tpu_custom_call.1} parent=1 // pred_region
      %s88 = ssub.s32 2048, 2048
      %89 = vsyncadd [#allocation12], %s88
      %s90 = sshll.u32 [#allocation11], 4
      %s91 = int_to_ptr.vmem [resolvable:$true] %s90
      %96 = dma.hbm_to_vmem [thread:$0]  %s8, 2048, %s91, [#allocation12], 128, 128, 8
    $region37: #{tpu_custom_call.1} parent=1 // pred_fallthru
      _
    // Predicated region
    $region38: #{tpu_custom_call.1} parent=1 // pred_check
      _
    $region39: #{tpu_custom_call.1} parent=1 // pred_check_branch
      %98 = sbr.rel (0) target = $region41
    $region40: #{tpu_custom_call.1} parent=1 // pred_region
      _
    $region41: #{tpu_custom_call.1} parent=1 // pred_fallthru
      _
    // Predicated region
    $region42: #{tpu_custom_call.1} parent=1 // pred_check
      _
    $region43: #{tpu_custom_call.1} parent=1 // pred_check_branch
      %100 = sbr.rel (0) target = $region45
    $region44: #{tpu_custom_call.1} parent=1 // pred_region
      %101 = dma.done [#allocation3], 128
    $region45: #{tpu_custom_call.1} parent=1 // pred_fallthru
      _
    // Predicated region
    $region46: #{tpu_custom_call.1} parent=1 // pred_check
      _
    $region47: #{tpu_custom_call.1} parent=1 // pred_check_branch
      %103 = sbr.rel (0) target = $region49
    $region48: #{tpu_custom_call.1} parent=1 // pred_region
      %104 = dma.done [#allocation6], 128
    $region49: #{tpu_custom_call.1} parent=1 // pred_fallthru
      _
    // Predicated region
    $region50: #{tpu_custom_call.1} parent=1 // pred_check
      _
    $region51: #{tpu_custom_call.1} parent=1 // pred_check_branch
      %106 = sbr.rel (0) target = $region53
    $region52: #{tpu_custom_call.1} parent=1 // pred_region
      %107 = dma.done [#allocation6], 2048
    $region53: #{tpu_custom_call.1} parent=1 // pred_fallthru
      _
    // Predicated region
    $region54: #{tpu_custom_call.1} parent=1 // pred_check
      _
    $region55: #{tpu_custom_call.1} parent=1 // pred_check_branch
      %109 = sbr.rel (0) target = $region57
    $region56: #{tpu_custom_call.1} parent=1 // pred_region
      %110 = dma.done [#allocation9], 2048
    $region57: #{tpu_custom_call.1} parent=1 // pred_fallthru
      _
    // Predicated region
    $region58: #{tpu_custom_call.1} parent=1 // pred_check
      _
    $region59: #{tpu_custom_call.1} parent=1 // pred_check_branch
      %112 = sbr.rel (0) target = $region61
    $region60: #{tpu_custom_call.1} parent=1 // pred_region
      %113 = dma.done [#allocation9], 2048
    $region61: #{tpu_custom_call.1} parent=1 // pred_fallthru
      _
    // Predicated region
    $region62: #{tpu_custom_call.1} parent=1 // pred_check
      _
    $region63: #{tpu_custom_call.1} parent=1 // pred_check_branch
      %115 = sbr.rel (0) target = $region65
    $region64: #{tpu_custom_call.1} parent=1 // pred_region
      %116 = dma.done [#allocation12], 2048
    $region65: #{tpu_custom_call.1} parent=1 // pred_fallthru
      _
    %v117 = vld [vmem:[#allocation2] sm:$0xff]
    %v118 = vld [vmem:[#allocation7] sm:$0xff]
    %v119 = vld [vmem:[#allocation7 + $0x8] sm:$0xff]
    %v120 = vld [vmem:[#allocation7 + $0x10] sm:$0xff]
    %v121 = vld [vmem:[#allocation7 + $0x18] sm:$0xff]
    %v122 = vld [vmem:[#allocation7 + $0x20] sm:$0xff]
    %v123 = vld [vmem:[#allocation7 + $0x28] sm:$0xff]
    %v124 = vld [vmem:[#allocation7 + $0x30] sm:$0xff]
    %v125 = vld [vmem:[#allocation7 + $0x38] sm:$0xff]
    %v126 = vld [vmem:[#allocation7 + $0x40] sm:$0xff]
    %v127 = vld [vmem:[#allocation7 + $0x48] sm:$0xff]
    %v128 = vld [vmem:[#allocation7 + $0x50] sm:$0xff]
    %v129 = vld [vmem:[#allocation7 + $0x58] sm:$0xff]
    %v130 = vld [vmem:[#allocation7 + $0x60] sm:$0xff]
    %v131 = vld [vmem:[#allocation7 + $0x68] sm:$0xff]
    %v132 = vld [vmem:[#allocation7 + $0x70] sm:$0xff]
    %v133 = vld [vmem:[#allocation7 + $0x78] sm:$0xff]
    %v134 = vld [vmem:[%s3] sm:$0x1]
    %v136 = vlaneseq
    %v137 = vshrl.u32 %v136, 7
    %v138 = vsub.s32 0, %v137
    %v139 = vrot.slane %v134, %v138
    %141 = vmatprep.subr.mxu0 0.0
    %142 = vmatpush1.msra.mxu0 %v133
    %143 = vmatprep.subr.mxu0 0.0
    %144 = vmatpush1.msra.mxu0 %v132
    %145 = vmatprep.subr.mxu0 0.0
    %146 = vmatpush1.msra.mxu0 %v131
    %147 = vmatprep.subr.mxu0 0.0
    %148 = vmatpush1.msra.mxu0 %v130
    %149 = vmatprep.subr.mxu0 0.0
    %150 = vmatpush1.msra.mxu0 %v129
    %151 = vmatprep.subr.mxu0 0.0
    %152 = vmatpush1.msra.mxu0 %v128
    %153 = vmatprep.subr.mxu0 0.0
    %154 = vmatpush1.msra.mxu0 %v127
    %155 = vmatprep.subr.mxu0 0.0
    %156 = vmatpush1.msra.mxu0 %v126
    %157 = vmatprep.subr.mxu0 0.0
    %158 = vmatpush1.msra.mxu0 %v125
    %159 = vmatprep.subr.mxu0 0.0
    %160 = vmatpush1.msra.mxu0 %v124
    %161 = vmatprep.subr.mxu0 0.0
    %162 = vmatpush1.msra.mxu0 %v123
    %163 = vmatprep.subr.mxu0 0.0
    %164 = vmatpush1.msra.mxu0 %v122
    %165 = vmatprep.subr.mxu0 0.0
    %166 = vmatpush1.msra.mxu0 %v121
    %167 = vmatprep.subr.mxu0 0.0
    %168 = vmatpush1.msra.mxu0 %v120
    %169 = vmatprep.subr.mxu0 0.0
    %170 = vmatpush1.msra.mxu0 %v119
    %171 = vmatprep.subr.mxu0 0.0
    %172 = vmatpush1.msra.mxu0 %v118
    %173 = vmatprep.subr.mxu0 0.0
    %174 = vmatpush2.msra.mxu0 0.0
    %175 = vmatprep.subr.mxu0 0.0
    %176 = vmatpush2.msra.mxu0 0.0
    %177 = vmatprep.subr.mxu0 0.0
    %178 = vmatpush2.msra.mxu0 0.0
    %179 = vmatprep.subr.mxu0 0.0
    %180 = vmatpush2.msra.mxu0 0.0
    %181 = vmatprep.subr.mxu0 0.0
    %182 = vmatpush2.msra.mxu0 0.0
    %183 = vmatprep.subr.mxu0 0.0
    %184 = vmatpush2.msra.mxu0 0.0
    %185 = vmatprep.subr.mxu0 0.0
    %186 = vmatpush2.msra.mxu0 0.0
    %187 = vmatprep.subr.mxu0 0.0
    %188 = vmatpush2.msra.mxu0 0.0
    %189 = vmatprep.subr.mxu0 0.0
    %190 = vmatpush2.msra.mxu0 0.0
    %191 = vmatprep.subr.mxu0 0.0
    %192 = vmatpush2.msra.mxu0 0.0
    %193 = vmatprep.subr.mxu0 0.0
    %194 = vmatpush2.msra.mxu0 0.0
    %195 = vmatprep.subr.mxu0 0.0
    %196 = vmatpush2.msra.mxu0 0.0
    %197 = vmatprep.subr.mxu0 0.0
    %198 = vmatpush2.msra.mxu0 0.0
    %199 = vmatprep.subr.mxu0 0.0
    %200 = vmatpush2.msra.mxu0 0.0
    %201 = vmatprep.subr.mxu0 0.0
    %202 = vmatpush2.msra.mxu0 0.0
    %203 = vmatprep.subr.mxu0 0.0
    %204 = vmatpush2.msra.mxu0 0.0
    %205 = vmatprep.mubr.f32.mxu0 0.0
    %206 = vmatmul.mubr.f32.gmra.mxu0 %v117
    %v207 = vpop.f32.mrf.mxu0
    %v208 = vadd.f32 %v139, %v207
    %v209 = vpop.f32.mrf.mxu0
    %210 = vdwg.mxu0
    %v211 = vmax.f32 %v208, 0.0
    %v212 = vld [vmem:[#allocation8] sm:$0xff]
    %v213 = vld [vmem:[#allocation8 + $0x8] sm:$0xff]
    %v214 = vld [vmem:[#allocation8 + $0x10] sm:$0xff]
    %v215 = vld [vmem:[#allocation8 + $0x18] sm:$0xff]
    %v216 = vld [vmem:[#allocation8 + $0x20] sm:$0xff]
    %v217 = vld [vmem:[#allocation8 + $0x28] sm:$0xff]
    %v218 = vld [vmem:[#allocation8 + $0x30] sm:$0xff]
    %v219 = vld [vmem:[#allocation8 + $0x38] sm:$0xff]
    %v220 = vld [vmem:[#allocation8 + $0x40] sm:$0xff]
    %v221 = vld [vmem:[#allocation8 + $0x48] sm:$0xff]
    %v222 = vld [vmem:[#allocation8 + $0x50] sm:$0xff]
    %v223 = vld [vmem:[#allocation8 + $0x58] sm:$0xff]
    %v224 = vld [vmem:[#allocation8 + $0x60] sm:$0xff]
    %v225 = vld [vmem:[#allocation8 + $0x68] sm:$0xff]
    %v226 = vld [vmem:[#allocation8 + $0x70] sm:$0xff]
    %v227 = vld [vmem:[#allocation8 + $0x78] sm:$0xff]
    %v228 = vld [vmem:[%s5] sm:$0x1]
    %v230 = vlaneseq
    %v231 = vshrl.u32 %v230, 7
    %v232 = vsub.s32 0, %v231
    %v233 = vrot.slane %v228, %v232
    %235 = vmatprep.subr.mxu0 0.0
    %236 = vmatpush1.msra.mxu0 %v227
    %237 = vmatprep.subr.mxu0 0.0
    %238 = vmatpush1.msra.mxu0 %v226
    %239 = vmatprep.subr.mxu0 0.0
    %240 = vmatpush1.msra.mxu0 %v225
    %241 = vmatprep.subr.mxu0 0.0
    %242 = vmatpush1.msra.mxu0 %v224
    %243 = vmatprep.subr.mxu0 0.0
    %244 = vmatpush1.msra.mxu0 %v223
    %245 = vmatprep.subr.mxu0 0.0
    %246 = vmatpush1.msra.mxu0 %v222
    %247 = vmatprep.subr.mxu0 0.0
    %248 = vmatpush1.msra.mxu0 %v221
    %249 = vmatprep.subr.mxu0 0.0
    %250 = vmatpush1.msra.mxu0 %v220
    %251 = vmatprep.subr.mxu0 0.0
    %252 = vmatpush1.msra.mxu0 %v219
    %253 = vmatprep.subr.mxu0 0.0
    %254 = vmatpush1.msra.mxu0 %v218
    %255 = vmatprep.subr.mxu0 0.0
    %256 = vmatpush1.msra.mxu0 %v217
    %257 = vmatprep.subr.mxu0 0.0
    %258 = vmatpush1.msra.mxu0 %v216
    %259 = vmatprep.subr.mxu0 0.0
    %260 = vmatpush1.msra.mxu0 %v215
    %261 = vmatprep.subr.mxu0 0.0
    %262 = vmatpush1.msra.mxu0 %v214
    %263 = vmatprep.subr.mxu0 0.0
    %264 = vmatpush1.msra.mxu0 %v213
    %265 = vmatprep.subr.mxu0 0.0
    %266 = vmatpush1.msra.mxu0 %v212
    %267 = vmatprep.subr.mxu0 0.0
    %268 = vmatpush2.msra.mxu0 0.0
    %269 = vmatprep.subr.mxu0 0.0
    %270 = vmatpush2.msra.mxu0 0.0
    %271 = vmatprep.subr.mxu0 0.0
    %272 = vmatpush2.msra.mxu0 0.0
    %273 = vmatprep.subr.mxu0 0.0
    %274 = vmatpush2.msra.mxu0 0.0
    %275 = vmatprep.subr.mxu0 0.0
    %276 = vmatpush2.msra.mxu0 0.0
    %277 = vmatprep.subr.mxu0 0.0
    %278 = vmatpush2.msra.mxu0 0.0
    %279 = vmatprep.subr.mxu0 0.0
    %280 = vmatpush2.msra.mxu0 0.0
    %281 = vmatprep.subr.mxu0 0.0
    %282 = vmatpush2.msra.mxu0 0.0
    %283 = vmatprep.subr.mxu0 0.0
    %284 = vmatpush2.msra.mxu0 0.0
    %285 = vmatprep.subr.mxu0 0.0
    %286 = vmatpush2.msra.mxu0 0.0
    %287 = vmatprep.subr.mxu0 0.0
    %288 = vmatpush2.msra.mxu0 0.0
    %289 = vmatprep.subr.mxu0 0.0
    %290 = vmatpush2.msra.mxu0 0.0
    %291 = vmatprep.subr.mxu0 0.0
    %292 = vmatpush2.msra.mxu0 0.0
    %293 = vmatprep.subr.mxu0 0.0
    %294 = vmatpush2.msra.mxu0 0.0
    %295 = vmatprep.subr.mxu0 0.0
    %296 = vmatpush2.msra.mxu0 0.0
    %297 = vmatprep.subr.mxu0 0.0
    %298 = vmatpush2.msra.mxu0 0.0
    %299 = vmatprep.mubr.f32.mxu0 0.0
    %300 = vmatmul.mubr.f32.gmra.mxu0 %v211
    %v301 = vpop.f32.mrf.mxu0
    %v302 = vadd.f32 %v233, %v301
    %v303 = vpop.f32.mrf.mxu0
    %304 = vdwg.mxu0
    %305 = vst [vmem:[#allocation14] sm:$0xff] %v302
    %v306 = vlaneseq
    %v307 = vand.u32 %v306, 127
    %vm308 = vcmp.lt.s32.totalorder %v307, 16
    %v309 = vmul.f32 %v302, 0.5
    %v310 = vmul.f32 %v309, 1.442695
    %v311 = vpow.pop %v310
    %v312 = vld [vmem:[#allocation5] sm:$0xff]
    %v313 = vmul.f32 %v311, %v312
    %v314 = vsel %vm308, %v302, %v313
    %v315 = vld [vmem:[#allocation10] sm:$0xff]
    %v316 = vld [vmem:[#allocation10 + $0x8] sm:$0xff]
    %v317 = vld [vmem:[#allocation10 + $0x10] sm:$0xff]
    %v318 = vld [vmem:[#allocation10 + $0x18] sm:$0xff]
    %v319 = vld [vmem:[#allocation10 + $0x20] sm:$0xff]
    %v320 = vld [vmem:[#allocation10 + $0x28] sm:$0xff]
    %v321 = vld [vmem:[#allocation10 + $0x30] sm:$0xff]
    %v322 = vld [vmem:[#allocation10 + $0x38] sm:$0xff]
    %v323 = vld [vmem:[#allocation10 + $0x40] sm:$0xff]
    %v324 = vld [vmem:[#allocation10 + $0x48] sm:$0xff]
    %v325 = vld [vmem:[#allocation10 + $0x50] sm:$0xff]
    %v326 = vld [vmem:[#allocation10 + $0x58] sm:$0xff]
    %v327 = vld [vmem:[#allocation10 + $0x60] sm:$0xff]
    %v328 = vld [vmem:[#allocation10 + $0x68] sm:$0xff]
    %v329 = vld [vmem:[#allocation10 + $0x70] sm:$0xff]
    %v330 = vld [vmem:[#allocation10 + $0x78] sm:$0xff]
    %v331 = vld [vmem:[%s7] sm:$0x1]
    %v333 = vlaneseq
    %v334 = vshrl.u32 %v333, 7
    %v335 = vsub.s32 0, %v334
    %v336 = vrot.slane %v331, %v335
    %338 = vmatprep.subr.mxu0 0.0
    %339 = vmatpush1.msra.mxu0 %v330
    %340 = vmatprep.subr.mxu0 0.0
    %341 = vmatpush1.msra.mxu0 %v329
    %342 = vmatprep.subr.mxu0 0.0
    %343 = vmatpush1.msra.mxu0 %v328
    %344 = vmatprep.subr.mxu0 0.0
    %345 = vmatpush1.msra.mxu0 %v327
    %346 = vmatprep.subr.mxu0 0.0
    %347 = vmatpush1.msra.mxu0 %v326
    %348 = vmatprep.subr.mxu0 0.0
    %349 = vmatpush1.msra.mxu0 %v325
    %350 = vmatprep.subr.mxu0 0.0
    %351 = vmatpush1.msra.mxu0 %v324
    %352 = vmatprep.subr.mxu0 0.0
    %353 = vmatpush1.msra.mxu0 %v323
    %354 = vmatprep.subr.mxu0 0.0
    %355 = vmatpush1.msra.mxu0 %v322
    %356 = vmatprep.subr.mxu0 0.0
    %357 = vmatpush1.msra.mxu0 %v321
    %358 = vmatprep.subr.mxu0 0.0
    %359 = vmatpush1.msra.mxu0 %v320
    %360 = vmatprep.subr.mxu0 0.0
    %361 = vmatpush1.msra.mxu0 %v319
    %362 = vmatprep.subr.mxu0 0.0
    %363 = vmatpush1.msra.mxu0 %v318
    %364 = vmatprep.subr.mxu0 0.0
    %365 = vmatpush1.msra.mxu0 %v317
    %366 = vmatprep.subr.mxu0 0.0
    %367 = vmatpush1.msra.mxu0 %v316
    %368 = vmatprep.subr.mxu0 0.0
    %369 = vmatpush1.msra.mxu0 %v315
    %370 = vmatprep.subr.mxu0 0.0
    %371 = vmatpush2.msra.mxu0 0.0
    %372 = vmatprep.subr.mxu0 0.0
    %373 = vmatpush2.msra.mxu0 0.0
    %374 = vmatprep.subr.mxu0 0.0
    %375 = vmatpush2.msra.mxu0 0.0
    %376 = vmatprep.subr.mxu0 0.0
    %377 = vmatpush2.msra.mxu0 0.0
    %378 = vmatprep.subr.mxu0 0.0
    %379 = vmatpush2.msra.mxu0 0.0
    %380 = vmatprep.subr.mxu0 0.0
    %381 = vmatpush2.msra.mxu0 0.0
    %382 = vmatprep.subr.mxu0 0.0
    %383 = vmatpush2.msra.mxu0 0.0
    %384 = vmatprep.subr.mxu0 0.0
    %385 = vmatpush2.msra.mxu0 0.0
    %386 = vmatprep.subr.mxu0 0.0
    %387 = vmatpush2.msra.mxu0 0.0
    %388 = vmatprep.subr.mxu0 0.0
    %389 = vmatpush2.msra.mxu0 0.0
    %390 = vmatprep.subr.mxu0 0.0
    %391 = vmatpush2.msra.mxu0 0.0
    %392 = vmatprep.subr.mxu0 0.0
    %393 = vmatpush2.msra.mxu0 0.0
    %394 = vmatprep.subr.mxu0 0.0
    %395 = vmatpush2.msra.mxu0 0.0
    %396 = vmatprep.subr.mxu0 0.0
    %397 = vmatpush2.msra.mxu0 0.0
    %398 = vmatprep.subr.mxu0 0.0
    %399 = vmatpush2.msra.mxu0 0.0
    %400 = vmatprep.subr.mxu0 0.0
    %401 = vmatpush2.msra.mxu0 0.0
    %402 = vmatprep.mubr.f32.mxu0 0.0
    %403 = vmatmul.mubr.f32.gmra.mxu0 %v314
    %v404 = vpop.f32.mrf.mxu0
    %v405 = vadd.f32 %v336, %v404
    %v406 = vpop.f32.mrf.mxu0
    %407 = vdwg.mxu0
    %v408 = vmax.f32 %v405, 0.0
    %v409 = vld [vmem:[#allocation11] sm:$0xff]
    %v410 = vld [vmem:[#allocation11 + $0x8] sm:$0xff]
    %v411 = vld [vmem:[#allocation11 + $0x10] sm:$0xff]
    %v412 = vld [vmem:[#allocation11 + $0x18] sm:$0xff]
    %v413 = vld [vmem:[#allocation11 + $0x20] sm:$0xff]
    %v414 = vld [vmem:[#allocation11 + $0x28] sm:$0xff]
    %v415 = vld [vmem:[#allocation11 + $0x30] sm:$0xff]
    %v416 = vld [vmem:[#allocation11 + $0x38] sm:$0xff]
    %v417 = vld [vmem:[#allocation11 + $0x40] sm:$0xff]
    %v418 = vld [vmem:[#allocation11 + $0x48] sm:$0xff]
    %v419 = vld [vmem:[#allocation11 + $0x50] sm:$0xff]
    %v420 = vld [vmem:[#allocation11 + $0x58] sm:$0xff]
    %v421 = vld [vmem:[#allocation11 + $0x60] sm:$0xff]
    %v422 = vld [vmem:[#allocation11 + $0x68] sm:$0xff]
    %v423 = vld [vmem:[#allocation11 + $0x70] sm:$0xff]
    %v424 = vld [vmem:[#allocation11 + $0x78] sm:$0xff]
    %v425 = vld [vmem:[%s9] sm:$0x1]
    %v427 = vlaneseq
    %v428 = vshrl.u32 %v427, 7
    %v429 = vsub.s32 0, %v428
    %v430 = vrot.slane %v425, %v429
    %432 = vmatprep.subr.mxu0 0.0
    %433 = vmatpush1.msra.mxu0 %v424
    %434 = vmatprep.subr.mxu0 0.0
    %435 = vmatpush1.msra.mxu0 %v423
    %436 = vmatprep.subr.mxu0 0.0
    %437 = vmatpush1.msra.mxu0 %v422
    %438 = vmatprep.subr.mxu0 0.0
    %439 = vmatpush1.msra.mxu0 %v421
    %440 = vmatprep.subr.mxu0 0.0
    %441 = vmatpush1.msra.mxu0 %v420
    %442 = vmatprep.subr.mxu0 0.0
    %443 = vmatpush1.msra.mxu0 %v419
    %444 = vmatprep.subr.mxu0 0.0
    %445 = vmatpush1.msra.mxu0 %v418
    %446 = vmatprep.subr.mxu0 0.0
    %447 = vmatpush1.msra.mxu0 %v417
    %448 = vmatprep.subr.mxu0 0.0
    %449 = vmatpush1.msra.mxu0 %v416
    %450 = vmatprep.subr.mxu0 0.0
    %451 = vmatpush1.msra.mxu0 %v415
    %452 = vmatprep.subr.mxu0 0.0
    %453 = vmatpush1.msra.mxu0 %v414
    %454 = vmatprep.subr.mxu0 0.0
    %455 = vmatpush1.msra.mxu0 %v413
    %456 = vmatprep.subr.mxu0 0.0
    %457 = vmatpush1.msra.mxu0 %v412
    %458 = vmatprep.subr.mxu0 0.0
    %459 = vmatpush1.msra.mxu0 %v411
    %460 = vmatprep.subr.mxu0 0.0
    %461 = vmatpush1.msra.mxu0 %v410
    %462 = vmatprep.subr.mxu0 0.0
    %463 = vmatpush1.msra.mxu0 %v409
    %464 = vmatprep.subr.mxu0 0.0
    %465 = vmatpush2.msra.mxu0 0.0
    %466 = vmatprep.subr.mxu0 0.0
    %467 = vmatpush2.msra.mxu0 0.0
    %468 = vmatprep.subr.mxu0 0.0
    %469 = vmatpush2.msra.mxu0 0.0
    %470 = vmatprep.subr.mxu0 0.0
    %471 = vmatpush2.msra.mxu0 0.0
    %472 = vmatprep.subr.mxu0 0.0
    %473 = vmatpush2.msra.mxu0 0.0
    %474 = vmatprep.subr.mxu0 0.0
    %475 = vmatpush2.msra.mxu0 0.0
    %476 = vmatprep.subr.mxu0 0.0
    %477 = vmatpush2.msra.mxu0 0.0
    %478 = vmatprep.subr.mxu0 0.0
    %479 = vmatpush2.msra.mxu0 0.0
    %480 = vmatprep.subr.mxu0 0.0
    %481 = vmatpush2.msra.mxu0 0.0
    %482 = vmatprep.subr.mxu0 0.0
    %483 = vmatpush2.msra.mxu0 0.0
    %484 = vmatprep.subr.mxu0 0.0
    %485 = vmatpush2.msra.mxu0 0.0
    %486 = vmatprep.subr.mxu0 0.0
    %487 = vmatpush2.msra.mxu0 0.0
    %488 = vmatprep.subr.mxu0 0.0
    %489 = vmatpush2.msra.mxu0 0.0
    %490 = vmatprep.subr.mxu0 0.0
    %491 = vmatpush2.msra.mxu0 0.0
    %492 = vmatprep.subr.mxu0 0.0
    %493 = vmatpush2.msra.mxu0 0.0
    %494 = vmatprep.subr.mxu0 0.0
    %495 = vmatpush2.msra.mxu0 0.0
    %496 = vmatprep.mubr.f32.mxu0 0.0
    %497 = vmatmul.mubr.f32.gmra.mxu0 %v408
    %v498 = vpop.f32.mrf.mxu0
    %v499 = vadd.f32 %v430, %v498
    %v500 = vpop.f32.mrf.mxu0
    %501 = vdwg.mxu0
    %v502 = vxor.u32 %v499, 2147483648
    %v503 = vmul.f32 %v502, 1.442695
    %v504 = vpow.pop %v503
    %v505 = vadd.f32 %v504, 1.0
    %v506 = vrcp.pop %v505
    %v507 = vmul.f32 1.0, %v506
    %508 = vst [vmem:[#allocation13] sm:$0xff] %v507
    // Predicated region
    $region66: #{tpu_custom_call.1} parent=1 // pred_check
      _
    $region67: #{tpu_custom_call.1} parent=1 // pred_check_branch
      %510 = sbr.rel (0) target = $region69
    $region68: #{tpu_custom_call.1} parent=1 // pred_region
      %s512 = ssub.s32 128, 128
      %513 = vsyncadd [#allocation4], %s512
      %s515 = sshll.u32 [#allocation13], 4
      %s516 = int_to_ptr.vmem [resolvable:$true] %s515
      %518 = dma.vmem_to_hbm [thread:$0]  %s516, 128, %s10, [#allocation4]
    $region69: #{tpu_custom_call.1} parent=1 // pred_fallthru
      _
    // Predicated region
    $region70: #{tpu_custom_call.1} parent=1 // pred_check
      _
    $region71: #{tpu_custom_call.1} parent=1 // pred_check_branch
      %520 = sbr.rel (0) target = $region73
    $region72: #{tpu_custom_call.1} parent=1 // pred_region
      %s522 = ssub.s32 128, 128
      %523 = vsyncadd [#allocation15], %s522
      %s525 = sshll.u32 [#allocation14], 4
      %s526 = int_to_ptr.vmem [resolvable:$true] %s525
      %528 = dma.vmem_to_hbm [thread:$0]  %s526, 128, %s11, [#allocation15]
    $region73: #{tpu_custom_call.1} parent=1 // pred_fallthru
      _
    // Predicated region
    $region74: #{tpu_custom_call.1} parent=1 // pred_check
      _
    $region75: #{tpu_custom_call.1} parent=1 // pred_check_branch
      %530 = sbr.rel (0) target = $region77
    $region76: #{tpu_custom_call.1} parent=1 // pred_region
      %531 = dma.done [#allocation4], 128
    $region77: #{tpu_custom_call.1} parent=1 // pred_fallthru
      _
    // Predicated region
    $region78: #{tpu_custom_call.1} parent=1 // pred_check
      _
    $region79: #{tpu_custom_call.1} parent=1 // pred_check_branch
      %533 = sbr.rel (0) target = $region81
    $region80: #{tpu_custom_call.1} parent=1 // pred_region
      %534 = dma.done [#allocation15], 128
    $region81: #{tpu_custom_call.1} parent=1 // pred_fallthru
      _
    %535 = vsyncpa [#allocation3], 1
    %536 = vsyncpa [#allocation6], 1
    %537 = vsyncpa [#allocation9], 1
    %538 = vsyncpa [#allocation12], 1
    %539 = vsyncpa [#allocation4], 1
    %540 = vsyncpa [#allocation15], 1

// kernel: tpu_custom_call.1
$region0: #{tpu_custom_call.1}
  #allocation0 [shape = 'u32[]', space=smem, size = 0x4, offset = 0x4, fixed_abs, tag = 'smem constant byte address 0x4 - core index']
  #allocation1 [shape = 'u32[144,128]{1,0:T(1,128)}', space=vmem, size = 0x12000, scoped, tag = 'internal scratch']
  %s0 = inlined_call_operand.hbm [shape: f32[8,128], index: 0, kind: input, shape index: {}]
  %s1 = inlined_call_operand.hbm [shape: f32[8,128], index: 1, kind: input, shape index: {}]
  %s2 = inlined_call_operand.hbm [shape: f32[128,128], index: 2, kind: input, shape index: {}]
  %s3 = inlined_call_operand.vmem [shape: f32[1,128], index: 3, kind: input, shape index: {}]
  %s4 = inlined_call_operand.hbm [shape: f32[128,128], index: 4, kind: input, shape index: {}]
  %s5 = inlined_call_operand.vmem [shape: f32[1,128], index: 5, kind: input, shape index: {}]
  %s6 = inlined_call_operand.hbm [shape: f32[128,128], index: 6, kind: input, shape index: {}]
  %s7 = inlined_call_operand.vmem [shape: f32[1,128], index: 7, kind: input, shape index: {}]
  %s8 = inlined_call_operand.hbm [shape: f32[128,128], index: 8, kind: input, shape index: {}]
  %s9 = inlined_call_operand.vmem [shape: f32[1,128], index: 9, kind: input, shape index: {}]
  %s10 = inlined_call_operand.hbm [shape: f32[8,128], index: 10, kind: output, shape index: {0}]
  %s11 = inlined_call_operand.hbm [shape: f32[8,128], index: 11, kind: output, shape index: {1}]
  %12 = xla_tuple %s10, %s11
  %s13 = sld [smem:[#allocation0]]
  $region82: #{tpu_custom_call.1} parent=0
    _
  %s15 = ssub.s32 1, %s13
  %s16 = scalar_select 0, %s15, %s13
  $region1: #{tpu_custom_call.1} parent=0
    #allocation2 [shape = 'u8[4096]{0}', space=vmem, size = 0x1000, scoped, tag = 'input window, operand 0, single buffered']
    #allocation3 [shape = 's32[1]{0}', space=sflag, size = 0x4, scoped, tag = 'scoped memory for tpu_custom_call.1']
    #allocation4 [shape = 's32[1]{0}', space=sflag, size = 0x4, scoped, tag = 'scoped memory for tpu_custom_call.1']
    #allocation5 [shape = 'u8[4096]{0}', space=vmem, size = 0x1000, scoped, tag = 'input window, operand 1, single buffered']
    #allocation6 [shape = 's32[1]{0}', space=sflag, size = 0x4, scoped, tag = 'scoped memory for tpu_custom_call.1']
    #allocation7 [shape = 'u8[65536]{0}', space=vmem, size = 0x10000, scoped, tag = 'input window, operand 2, single buffered']
    #allocation8 [shape = 'u8[65536]{0}', space=vmem, size = 0x10000, scoped, tag = 'input window, operand 4, single buffered']
    #allocation9 [shape = 's32[1]{0}', space=sflag, size = 0x4, scoped, tag = 'scoped memory for tpu_custom_call.1']
    #allocation10 [shape = 'u8[65536]{0}', space=vmem, size = 0x10000, scoped, tag = 'input window, operand 6, single buffered']
    #allocation11 [shape = 'u8[65536]{0}', space=vmem, size = 0x10000, scoped, tag = 'input window, operand 8, single buffered']
    #allocation12 [shape = 's32[1]{0}', space=sflag, size = 0x4, scoped, tag = 'scoped memory for tpu_custom_call.1']
    #allocation13 [shape = 'u8[4096]{0}', space=vmem, size = 0x1000, scoped, tag = 'output window, operand 0, single buffered']
    #allocation14 [shape = 'u8[4096]{0}', space=vmem, size = 0x1000, scoped, tag = 'output window, operand 1, single buffered']
    #allocation15 [shape = 's32[1]{0}', space=sflag, size = 0x4, scoped, tag = 'scoped memory for tpu_custom_call.1']
    %17 = vsyncpa [#allocation3], 0
    %18 = vsyncpa [#allocation6], 0
    %19 = vsyncpa [#allocation9], 0
    %20 = vsyncpa [#allocation12], 0
    %21 = vsyncpa [#allocation4], 0
    %22 = vsyncpa [#allocation15], 0
    // Predicated region
    $region2: #{tpu_custom_call.1} parent=1 // pred_check
      _
    $region3: #{tpu_custom_call.1} parent=1 // pred_check_branch
      %24 = sbr.rel (0) target = $region5
    $region4: #{tpu_custom_call.1} parent=1 // pred_region
      %s26 = ssub.s32 128, 128
      %27 = vsyncadd [#allocation3], %s26
      %s29 = sshll.u32 [#allocation2], 4
      %s30 = int_to_ptr.vmem [resolvable:$true] %s29
      %32 = dma.hbm_to_vmem [thread:$0]  %s0, 128, %s30, [#allocation3]
    $region5: #{tpu_custom_call.1} parent=1 // pred_fallthru
      _
    // Predicated region
    $region6: #{tpu_custom_call.1} parent=1 // pred_check
      _
    $region7: #{tpu_custom_call.1} parent=1 // pred_check_branch
      %34 = sbr.rel (0) target = $region9
    $region8: #{tpu_custom_call.1} parent=1 // pred_region
      %s36 = ssub.s32 128, 128
      %37 = vsyncadd [#allocation6], %s36
      %s39 = sshll.u32 [#allocation5], 4
      %s40 = int_to_ptr.vmem [resolvable:$true] %s39
      %42 = dma.hbm_to_vmem [thread:$0]  %s1, 128, %s40, [#allocation6]
    $region9: #{tpu_custom_call.1} parent=1 // pred_fallthru
      _
    // Predicated region
    $region10: #{tpu_custom_call.1} parent=1 // pred_check
      _
    $region11: #{tpu_custom_call.1} parent=1 // pred_check_branch
      %44 = sbr.rel (0) target = $region13
    $region12: #{tpu_custom_call.1} parent=1 // pred_region
      %s46 = ssub.s32 2048, 2048
      %47 = vsyncadd [#allocation6], %s46
      %s48 = sshll.u32 [#allocation7], 4
      %s49 = int_to_ptr.vmem [resolvable:$true] %s48
      %54 = dma.hbm_to_vmem [thread:$0]  %s2, 2048, %s49, [#allocation6], 128, 128, 8
    $region13: #{tpu_custom_call.1} parent=1 // pred_fallthru
      _
    // Predicated region
    $region14: #{tpu_custom_call.1} parent=1 // pred_check
      _
    $region15: #{tpu_custom_call.1} parent=1 // pred_check_branch
      %56 = sbr.rel (0) target = $region17
    $region16: #{tpu_custom_call.1} parent=1 // pred_region
      _
    $region17: #{tpu_custom_call.1} parent=1 // pred_fallthru
      _
    // Predicated region
    $region18: #{tpu_custom_call.1} parent=1 // pred_check
      _
    $region19: #{tpu_custom_call.1} parent=1 // pred_check_branch
      %58 = sbr.rel (0) target = $region21
    $region20: #{tpu_custom_call.1} parent=1 // pred_region
      %s60 = ssub.s32 2048, 2048
      %61 = vsyncadd [#allocation9], %s60
      %s62 = sshll.u32 [#allocation8], 4
      %s63 = int_to_ptr.vmem [resolvable:$true] %s62
      %68 = dma.hbm_to_vmem [thread:$0]  %s4, 2048, %s63, [#allocation9], 128, 128, 8
    $region21: #{tpu_custom_call.1} parent=1 // pred_fallthru
      _
    // Predicated region
    $region22: #{tpu_custom_call.1} parent=1 // pred_check
      _
    $region23: #{tpu_custom_call.1} parent=1 // pred_check_branch
      %70 = sbr.rel (0) target = $region25
    $region24: #{tpu_custom_call.1} parent=1 // pred_region
      _
    $region25: #{tpu_custom_call.1} parent=1 // pred_fallthru
      _
    // Predicated region
    $region26: #{tpu_custom_call.1} parent=1 // pred_check
      _
    $region27: #{tpu_custom_call.1} parent=1 // pred_check_branch
      %72 = sbr.rel (0) target = $region29
    $region28: #{tpu_custom_call.1} parent=1 // pred_region
      %s74 = ssub.s32 2048, 2048
      %75 = vsyncadd [#allocation9], %s74
      %s76 = sshll.u32 [#allocation10], 4
      %s77 = int_to_ptr.vmem [resolvable:$true] %s76
      %82 = dma.hbm_to_vmem [thread:$0]  %s6, 2048, %s77, [#allocation9], 128, 128, 8
    $region29: #{tpu_custom_call.1} parent=1 // pred_fallthru
      _
    // Predicated region
    $region30: #{tpu_custom_call.1} parent=1 // pred_check
      _
    $region31: #{tpu_custom_call.1} parent=1 // pred_check_branch
      %84 = sbr.rel (0) target = $region33
    $region32: #{tpu_custom_call.1} parent=1 // pred_region
      _
    $region33: #{tpu_custom_call.1} parent=1 // pred_fallthru
      _
    // Predicated region
    $region34: #{tpu_custom_call.1} parent=1 // pred_check
      _
    $region35: #{tpu_custom_call.1} parent=1 // pred_check_branch
      %86 = sbr.rel (0) target = $region37
    $region36: #{tpu_custom_call.1} parent=1 // pred_region
      %s88 = ssub.s32 2048, 2048
      %89 = vsyncadd [#allocation12], %s88
      %s90 = sshll.u32 [#allocation11], 4
      %s91 = int_to_ptr.vmem [resolvable:$true] %s90
      %96 = dma.hbm_to_vmem [thread:$0]  %s8, 2048, %s91, [#allocation12], 128, 128, 8
    $region37: #{tpu_custom_call.1} parent=1 // pred_fallthru
      _
    // Predicated region
    $region38: #{tpu_custom_call.1} parent=1 // pred_check
      _
    $region39: #{tpu_custom_call.1} parent=1 // pred_check_branch
      %98 = sbr.rel (0) target = $region41
    $region40: #{tpu_custom_call.1} parent=1 // pred_region
      _
    $region41: #{tpu_custom_call.1} parent=1 // pred_fallthru
      _
    // Predicated region
    $region42: #{tpu_custom_call.1} parent=1 // pred_check
      _
    $region43: #{tpu_custom_call.1} parent=1 // pred_check_branch
      %100 = sbr.rel (0) target = $region45
    $region44: #{tpu_custom_call.1} parent=1 // pred_region
      %101 = dma.done [#allocation3], 128
    $region45: #{tpu_custom_call.1} parent=1 // pred_fallthru
      _
    // Predicated region
    $region46: #{tpu_custom_call.1} parent=1 // pred_check
      _
    $region47: #{tpu_custom_call.1} parent=1 // pred_check_branch
      %103 = sbr.rel (0) target = $region49
    $region48: #{tpu_custom_call.1} parent=1 // pred_region
      %104 = dma.done [#allocation6], 128
    $region49: #{tpu_custom_call.1} parent=1 // pred_fallthru
      _
    // Predicated region
    $region50: #{tpu_custom_call.1} parent=1 // pred_check
      _
    $region51: #{tpu_custom_call.1} parent=1 // pred_check_branch
      %106 = sbr.rel (0) target = $region53
    $region52: #{tpu_custom_call.1} parent=1 // pred_region
      %107 = dma.done [#allocation6], 2048
    $region53: #{tpu_custom_call.1} parent=1 // pred_fallthru
      _
    // Predicated region
    $region54: #{tpu_custom_call.1} parent=1 // pred_check
      _
    $region55: #{tpu_custom_call.1} parent=1 // pred_check_branch
      %109 = sbr.rel (0) target = $region57
    $region56: #{tpu_custom_call.1} parent=1 // pred_region
      %110 = dma.done [#allocation9], 2048
    $region57: #{tpu_custom_call.1} parent=1 // pred_fallthru
      _
    // Predicated region
    $region58: #{tpu_custom_call.1} parent=1 // pred_check
      _
    $region59: #{tpu_custom_call.1} parent=1 // pred_check_branch
      %112 = sbr.rel (0) target = $region61
    $region60: #{tpu_custom_call.1} parent=1 // pred_region
      %113 = dma.done [#allocation9], 2048
    $region61: #{tpu_custom_call.1} parent=1 // pred_fallthru
      _
    // Predicated region
    $region62: #{tpu_custom_call.1} parent=1 // pred_check
      _
    $region63: #{tpu_custom_call.1} parent=1 // pred_check_branch
      %115 = sbr.rel (0) target = $region65
    $region64: #{tpu_custom_call.1} parent=1 // pred_region
      %116 = dma.done [#allocation12], 2048
    $region65: #{tpu_custom_call.1} parent=1 // pred_fallthru
      _
    %v117 = vld [vmem:[#allocation2] sm:$0xff]
    %v118 = vld [vmem:[#allocation7] sm:$0xff]
    %v119 = vld [vmem:[#allocation7 + $0x8] sm:$0xff]
    %v120 = vld [vmem:[#allocation7 + $0x10] sm:$0xff]
    %v121 = vld [vmem:[#allocation7 + $0x18] sm:$0xff]
    %v122 = vld [vmem:[#allocation7 + $0x20] sm:$0xff]
    %v123 = vld [vmem:[#allocation7 + $0x28] sm:$0xff]
    %v124 = vld [vmem:[#allocation7 + $0x30] sm:$0xff]
    %v125 = vld [vmem:[#allocation7 + $0x38] sm:$0xff]
    %v126 = vld [vmem:[#allocation7 + $0x40] sm:$0xff]
    %v127 = vld [vmem:[#allocation7 + $0x48] sm:$0xff]
    %v128 = vld [vmem:[#allocation7 + $0x50] sm:$0xff]
    %v129 = vld [vmem:[#allocation7 + $0x58] sm:$0xff]
    %v130 = vld [vmem:[#allocation7 + $0x60] sm:$0xff]
    %v131 = vld [vmem:[#allocation7 + $0x68] sm:$0xff]
    %v132 = vld [vmem:[#allocation7 + $0x70] sm:$0xff]
    %v133 = vld [vmem:[#allocation7 + $0x78] sm:$0xff]
    %v134 = vld [vmem:[%s3] sm:$0x1]
    %v136 = vlaneseq
    %v137 = vshrl.u32 %v136, 7
    %v138 = vsub.s32 0, %v137
    %v139 = vrot.slane %v134, %v138
    %141 = vmatprep.subr.mxu0 0.0
    %142 = vmatpush1.msra.mxu0 %v133
    %143 = vmatprep.subr.mxu0 0.0
    %144 = vmatpush1.msra.mxu0 %v132
    %145 = vmatprep.subr.mxu0 0.0
    %146 = vmatpush1.msra.mxu0 %v131
    %147 = vmatprep.subr.mxu0 0.0
    %148 = vmatpush1.msra.mxu0 %v130
    %149 = vmatprep.subr.mxu0 0.0
    %150 = vmatpush1.msra.mxu0 %v129
    %151 = vmatprep.subr.mxu0 0.0
    %152 = vmatpush1.msra.mxu0 %v128
    %153 = vmatprep.subr.mxu0 0.0
    %154 = vmatpush1.msra.mxu0 %v127
    %155 = vmatprep.subr.mxu0 0.0
    %156 = vmatpush1.msra.mxu0 %v126
    %157 = vmatprep.subr.mxu0 0.0
    %158 = vmatpush1.msra.mxu0 %v125
    %159 = vmatprep.subr.mxu0 0.0
    %160 = vmatpush1.msra.mxu0 %v124
    %161 = vmatprep.subr.mxu0 0.0
    %162 = vmatpush1.msra.mxu0 %v123
    %163 = vmatprep.subr.mxu0 0.0
    %164 = vmatpush1.msra.mxu0 %v122
    %165 = vmatprep.subr.mxu0 0.0
    %166 = vmatpush1.msra.mxu0 %v121
    %167 = vmatprep.subr.mxu0 0.0
    %168 = vmatpush1.msra.mxu0 %v120
    %169 = vmatprep.subr.mxu0 0.0
    %170 = vmatpush1.msra.mxu0 %v119
    %171 = vmatprep.subr.mxu0 0.0
    %172 = vmatpush1.msra.mxu0 %v118
    %173 = vmatprep.subr.mxu0 0.0
    %174 = vmatpush2.msra.mxu0 0.0
    %175 = vmatprep.subr.mxu0 0.0
    %176 = vmatpush2.msra.mxu0 0.0
    %177 = vmatprep.subr.mxu0 0.0
    %178 = vmatpush2.msra.mxu0 0.0
    %179 = vmatprep.subr.mxu0 0.0
    %180 = vmatpush2.msra.mxu0 0.0
    %181 = vmatprep.subr.mxu0 0.0
    %182 = vmatpush2.msra.mxu0 0.0
    %183 = vmatprep.subr.mxu0 0.0
    %184 = vmatpush2.msra.mxu0 0.0
    %185 = vmatprep.subr.mxu0 0.0
    %186 = vmatpush2.msra.mxu0 0.0
    %187 = vmatprep.subr.mxu0 0.0
    %188 = vmatpush2.msra.mxu0 0.0
    %189 = vmatprep.subr.mxu0 0.0
    %190 = vmatpush2.msra.mxu0 0.0
    %191 = vmatprep.subr.mxu0 0.0
    %192 = vmatpush2.msra.mxu0 0.0
    %193 = vmatprep.subr.mxu0 0.0
    %194 = vmatpush2.msra.mxu0 0.0
    %195 = vmatprep.subr.mxu0 0.0
    %196 = vmatpush2.msra.mxu0 0.0
    %197 = vmatprep.subr.mxu0 0.0
    %198 = vmatpush2.msra.mxu0 0.0
    %199 = vmatprep.subr.mxu0 0.0
    %200 = vmatpush2.msra.mxu0 0.0
    %201 = vmatprep.subr.mxu0 0.0
    %202 = vmatpush2.msra.mxu0 0.0
    %203 = vmatprep.subr.mxu0 0.0
    %204 = vmatpush2.msra.mxu0 0.0
    %205 = vmatprep.mubr.f32.mxu0 0.0
    %206 = vmatmul.mubr.f32.gmra.mxu0 %v117
    %v207 = vpop.f32.mrf.mxu0
    %v208 = vadd.f32 %v139, %v207
    %v209 = vpop.f32.mrf.mxu0
    %210 = vdwg.mxu0
    %v211 = vmax.f32 %v208, 0.0
    %v212 = vld [vmem:[#allocation8] sm:$0xff]
    %v213 = vld [vmem:[#allocation8 + $0x8] sm:$0xff]
    %v214 = vld [vmem:[#allocation8 + $0x10] sm:$0xff]
    %v215 = vld [vmem:[#allocation8 + $0x18] sm:$0xff]
    %v216 = vld [vmem:[#allocation8 + $0x20] sm:$0xff]
    %v217 = vld [vmem:[#allocation8 + $0x28] sm:$0xff]
    %v218 = vld [vmem:[#allocation8 + $0x30] sm:$0xff]
    %v219 = vld [vmem:[#allocation8 + $0x38] sm:$0xff]
    %v220 = vld [vmem:[#allocation8 + $0x40] sm:$0xff]
    %v221 = vld [vmem:[#allocation8 + $0x48] sm:$0xff]
    %v222 = vld [vmem:[#allocation8 + $0x50] sm:$0xff]
    %v223 = vld [vmem:[#allocation8 + $0x58] sm:$0xff]
    %v224 = vld [vmem:[#allocation8 + $0x60] sm:$0xff]
    %v225 = vld [vmem:[#allocation8 + $0x68] sm:$0xff]
    %v226 = vld [vmem:[#allocation8 + $0x70] sm:$0xff]
    %v227 = vld [vmem:[#allocation8 + $0x78] sm:$0xff]
    %v228 = vld [vmem:[%s5] sm:$0x1]
    %v230 = vlaneseq
    %v231 = vshrl.u32 %v230, 7
    %v232 = vsub.s32 0, %v231
    %v233 = vrot.slane %v228, %v232
    %235 = vmatprep.subr.mxu0 0.0
    %236 = vmatpush1.msra.mxu0 %v227
    %237 = vmatprep.subr.mxu0 0.0
    %238 = vmatpush1.msra.mxu0 %v226
    %239 = vmatprep.subr.mxu0 0.0
    %240 = vmatpush1.msra.mxu0 %v225
    %241 = vmatprep.subr.mxu0 0.0
    %242 = vmatpush1.msra.mxu0 %v224
    %243 = vmatprep.subr.mxu0 0.0
    %244 = vmatpush1.msra.mxu0 %v223
    %245 = vmatprep.subr.mxu0 0.0
    %246 = vmatpush1.msra.mxu0 %v222
    %247 = vmatprep.subr.mxu0 0.0
    %248 = vmatpush1.msra.mxu0 %v221
    %249 = vmatprep.subr.mxu0 0.0
    %250 = vmatpush1.msra.mxu0 %v220
    %251 = vmatprep.subr.mxu0 0.0
    %252 = vmatpush1.msra.mxu0 %v219
    %253 = vmatprep.subr.mxu0 0.0
    %254 = vmatpush1.msra.mxu0 %v218
    %255 = vmatprep.subr.mxu0 0.0
    %256 = vmatpush1.msra.mxu0 %v217
    %257 = vmatprep.subr.mxu0 0.0
    %258 = vmatpush1.msra.mxu0 %v216
    %259 = vmatprep.subr.mxu0 0.0
    %260 = vmatpush1.msra.mxu0 %v215
    %261 = vmatprep.subr.mxu0 0.0
    %262 = vmatpush1.msra.mxu0 %v214
    %263 = vmatprep.subr.mxu0 0.0
    %264 = vmatpush1.msra.mxu0 %v213
    %265 = vmatprep.subr.mxu0 0.0
    %266 = vmatpush1.msra.mxu0 %v212
    %267 = vmatprep.subr.mxu0 0.0
    %268 = vmatpush2.msra.mxu0 0.0
    %269 = vmatprep.subr.mxu0 0.0
    %270 = vmatpush2.msra.mxu0 0.0
    %271 = vmatprep.subr.mxu0 0.0
    %272 = vmatpush2.msra.mxu0 0.0
    %273 = vmatprep.subr.mxu0 0.0
    %274 = vmatpush2.msra.mxu0 0.0
    %275 = vmatprep.subr.mxu0 0.0
    %276 = vmatpush2.msra.mxu0 0.0
    %277 = vmatprep.subr.mxu0 0.0
    %278 = vmatpush2.msra.mxu0 0.0
    %279 = vmatprep.subr.mxu0 0.0
    %280 = vmatpush2.msra.mxu0 0.0
    %281 = vmatprep.subr.mxu0 0.0
    %282 = vmatpush2.msra.mxu0 0.0
    %283 = vmatprep.subr.mxu0 0.0
    %284 = vmatpush2.msra.mxu0 0.0
    %285 = vmatprep.subr.mxu0 0.0
    %286 = vmatpush2.msra.mxu0 0.0
    %287 = vmatprep.subr.mxu0 0.0
    %288 = vmatpush2.msra.mxu0 0.0
    %289 = vmatprep.subr.mxu0 0.0
    %290 = vmatpush2.msra.mxu0 0.0
    %291 = vmatprep.subr.mxu0 0.0
    %292 = vmatpush2.msra.mxu0 0.0
    %293 = vmatprep.subr.mxu0 0.0
    %294 = vmatpush2.msra.mxu0 0.0
    %295 = vmatprep.subr.mxu0 0.0
    %296 = vmatpush2.msra.mxu0 0.0
    %297 = vmatprep.subr.mxu0 0.0
    %298 = vmatpush2.msra.mxu0 0.0
    %299 = vmatprep.mubr.f32.mxu0 0.0
    %300 = vmatmul.mubr.f32.gmra.mxu0 %v211
    %v301 = vpop.f32.mrf.mxu0
    %v302 = vadd.f32 %v233, %v301
    %v303 = vpop.f32.mrf.mxu0
    %304 = vdwg.mxu0
    %305 = vst [vmem:[#allocation14] sm:$0xff] %v302
    %v306 = vlaneseq
    %v307 = vand.u32 %v306, 127
    %vm308 = vcmp.lt.s32.totalorder %v307, 16
    %v309 = vmul.f32 %v302, 0.5
    %v310 = vmul.f32 %v309, 1.442695
    %v311 = vpow.pop %v310
    %v312 = vld [vmem:[#allocation5] sm:$0xff]
    %v313 = vmul.f32 %v311, %v312
    %v314 = vsel %vm308, %v302, %v313
    %v315 = vld [vmem:[#allocation10] sm:$0xff]
    %v316 = vld [vmem:[#allocation10 + $0x8] sm:$0xff]
    %v317 = vld [vmem:[#allocation10 + $0x10] sm:$0xff]
    %v318 = vld [vmem:[#allocation10 + $0x18] sm:$0xff]
    %v319 = vld [vmem:[#allocation10 + $0x20] sm:$0xff]
    %v320 = vld [vmem:[#allocation10 + $0x28] sm:$0xff]
    %v321 = vld [vmem:[#allocation10 + $0x30] sm:$0xff]
    %v322 = vld [vmem:[#allocation10 + $0x38] sm:$0xff]
    %v323 = vld [vmem:[#allocation10 + $0x40] sm:$0xff]
    %v324 = vld [vmem:[#allocation10 + $0x48] sm:$0xff]
    %v325 = vld [vmem:[#allocation10 + $0x50] sm:$0xff]
    %v326 = vld [vmem:[#allocation10 + $0x58] sm:$0xff]
    %v327 = vld [vmem:[#allocation10 + $0x60] sm:$0xff]
    %v328 = vld [vmem:[#allocation10 + $0x68] sm:$0xff]
    %v329 = vld [vmem:[#allocation10 + $0x70] sm:$0xff]
    %v330 = vld [vmem:[#allocation10 + $0x78] sm:$0xff]
    %v331 = vld [vmem:[%s7] sm:$0x1]
    %v333 = vlaneseq
    %v334 = vshrl.u32 %v333, 7
    %v335 = vsub.s32 0, %v334
    %v336 = vrot.slane %v331, %v335
    %338 = vmatprep.subr.mxu0 0.0
    %339 = vmatpush1.msra.mxu0 %v330
    %340 = vmatprep.subr.mxu0 0.0
    %341 = vmatpush1.msra.mxu0 %v329
    %342 = vmatprep.subr.mxu0 0.0
    %343 = vmatpush1.msra.mxu0 %v328
    %344 = vmatprep.subr.mxu0 0.0
    %345 = vmatpush1.msra.mxu0 %v327
    %346 = vmatprep.subr.mxu0 0.0
    %347 = vmatpush1.msra.mxu0 %v326
    %348 = vmatprep.subr.mxu0 0.0
    %349 = vmatpush1.msra.mxu0 %v325
    %350 = vmatprep.subr.mxu0 0.0
    %351 = vmatpush1.msra.mxu0 %v324
    %352 = vmatprep.subr.mxu0 0.0
    %353 = vmatpush1.msra.mxu0 %v323
    %354 = vmatprep.subr.mxu0 0.0
    %355 = vmatpush1.msra.mxu0 %v322
    %356 = vmatprep.subr.mxu0 0.0
    %357 = vmatpush1.msra.mxu0 %v321
    %358 = vmatprep.subr.mxu0 0.0
    %359 = vmatpush1.msra.mxu0 %v320
    %360 = vmatprep.subr.mxu0 0.0
    %361 = vmatpush1.msra.mxu0 %v319
    %362 = vmatprep.subr.mxu0 0.0
    %363 = vmatpush1.msra.mxu0 %v318
    %364 = vmatprep.subr.mxu0 0.0
    %365 = vmatpush1.msra.mxu0 %v317
    %366 = vmatprep.subr.mxu0 0.0
    %367 = vmatpush1.msra.mxu0 %v316
    %368 = vmatprep.subr.mxu0 0.0
    %369 = vmatpush1.msra.mxu0 %v315
    %370 = vmatprep.subr.mxu0 0.0
    %371 = vmatpush2.msra.mxu0 0.0
    %372 = vmatprep.subr.mxu0 0.0
    %373 = vmatpush2.msra.mxu0 0.0
    %374 = vmatprep.subr.mxu0 0.0
    %375 = vmatpush2.msra.mxu0 0.0
    %376 = vmatprep.subr.mxu0 0.0
    %377 = vmatpush2.msra.mxu0 0.0
    %378 = vmatprep.subr.mxu0 0.0
    %379 = vmatpush2.msra.mxu0 0.0
    %380 = vmatprep.subr.mxu0 0.0
    %381 = vmatpush2.msra.mxu0 0.0
    %382 = vmatprep.subr.mxu0 0.0
    %383 = vmatpush2.msra.mxu0 0.0
    %384 = vmatprep.subr.mxu0 0.0
    %385 = vmatpush2.msra.mxu0 0.0
    %386 = vmatprep.subr.mxu0 0.0
    %387 = vmatpush2.msra.mxu0 0.0
    %388 = vmatprep.subr.mxu0 0.0
    %389 = vmatpush2.msra.mxu0 0.0
    %390 = vmatprep.subr.mxu0 0.0
    %391 = vmatpush2.msra.mxu0 0.0
    %392 = vmatprep.subr.mxu0 0.0
    %393 = vmatpush2.msra.mxu0 0.0
    %394 = vmatprep.subr.mxu0 0.0
    %395 = vmatpush2.msra.mxu0 0.0
    %396 = vmatprep.subr.mxu0 0.0
    %397 = vmatpush2.msra.mxu0 0.0
    %398 = vmatprep.subr.mxu0 0.0
    %399 = vmatpush2.msra.mxu0 0.0
    %400 = vmatprep.subr.mxu0 0.0
    %401 = vmatpush2.msra.mxu0 0.0
    %402 = vmatprep.mubr.f32.mxu0 0.0
    %403 = vmatmul.mubr.f32.gmra.mxu0 %v314
    %v404 = vpop.f32.mrf.mxu0
    %v405 = vadd.f32 %v336, %v404
    %v406 = vpop.f32.mrf.mxu0
    %407 = vdwg.mxu0
    %v408 = vmax.f32 %v405, 0.0
    %v409 = vld [vmem:[#allocation11] sm:$0xff]
    %v410 = vld [vmem:[#allocation11 + $0x8] sm:$0xff]
    %v411 = vld [vmem:[#allocation11 + $0x10] sm:$0xff]
    %v412 = vld [vmem:[#allocation11 + $0x18] sm:$0xff]
    %v413 = vld [vmem:[#allocation11 + $0x20] sm:$0xff]
    %v414 = vld [vmem:[#allocation11 + $0x28] sm:$0xff]
    %v415 = vld [vmem:[#allocation11 + $0x30] sm:$0xff]
    %v416 = vld [vmem:[#allocation11 + $0x38] sm:$0xff]
    %v417 = vld [vmem:[#allocation11 + $0x40] sm:$0xff]
    %v418 = vld [vmem:[#allocation11 + $0x48] sm:$0xff]
    %v419 = vld [vmem:[#allocation11 + $0x50] sm:$0xff]
    %v420 = vld [vmem:[#allocation11 + $0x58] sm:$0xff]
    %v421 = vld [vmem:[#allocation11 + $0x60] sm:$0xff]
    %v422 = vld [vmem:[#allocation11 + $0x68] sm:$0xff]
    %v423 = vld [vmem:[#allocation11 + $0x70] sm:$0xff]
    %v424 = vld [vmem:[#allocation11 + $0x78] sm:$0xff]
    %v425 = vld [vmem:[%s9] sm:$0x1]
    %v427 = vlaneseq
    %v428 = vshrl.u32 %v427, 7
    %v429 = vsub.s32 0, %v428
    %v430 = vrot.slane %v425, %v429
    %432 = vmatprep.subr.mxu0 0.0
    %433 = vmatpush1.msra.mxu0 %v424
    %434 = vmatprep.subr.mxu0 0.0
    %435 = vmatpush1.msra.mxu0 %v423
    %436 = vmatprep.subr.mxu0 0.0
    %437 = vmatpush1.msra.mxu0 %v422
    %438 = vmatprep.subr.mxu0 0.0
    %439 = vmatpush1.msra.mxu0 %v421
    %440 = vmatprep.subr.mxu0 0.0
    %441 = vmatpush1.msra.mxu0 %v420
    %442 = vmatprep.subr.mxu0 0.0
    %443 = vmatpush1.msra.mxu0 %v419
    %444 = vmatprep.subr.mxu0 0.0
    %445 = vmatpush1.msra.mxu0 %v418
    %446 = vmatprep.subr.mxu0 0.0
    %447 = vmatpush1.msra.mxu0 %v417
    %448 = vmatprep.subr.mxu0 0.0
    %449 = vmatpush1.msra.mxu0 %v416
    %450 = vmatprep.subr.mxu0 0.0
    %451 = vmatpush1.msra.mxu0 %v415
    %452 = vmatprep.subr.mxu0 0.0
    %453 = vmatpush1.msra.mxu0 %v414
    %454 = vmatprep.subr.mxu0 0.0
    %455 = vmatpush1.msra.mxu0 %v413
    %456 = vmatprep.subr.mxu0 0.0
    %457 = vmatpush1.msra.mxu0 %v412
    %458 = vmatprep.subr.mxu0 0.0
    %459 = vmatpush1.msra.mxu0 %v411
    %460 = vmatprep.subr.mxu0 0.0
    %461 = vmatpush1.msra.mxu0 %v410
    %462 = vmatprep.subr.mxu0 0.0
    %463 = vmatpush1.msra.mxu0 %v409
    %464 = vmatprep.subr.mxu0 0.0
    %465 = vmatpush2.msra.mxu0 0.0
    %466 = vmatprep.subr.mxu0 0.0
    %467 = vmatpush2.msra.mxu0 0.0
    %468 = vmatprep.subr.mxu0 0.0
    %469 = vmatpush2.msra.mxu0 0.0
    %470 = vmatprep.subr.mxu0 0.0
    %471 = vmatpush2.msra.mxu0 0.0
    %472 = vmatprep.subr.mxu0 0.0
    %473 = vmatpush2.msra.mxu0 0.0
    %474 = vmatprep.subr.mxu0 0.0
    %475 = vmatpush2.msra.mxu0 0.0
    %476 = vmatprep.subr.mxu0 0.0
    %477 = vmatpush2.msra.mxu0 0.0
    %478 = vmatprep.subr.mxu0 0.0
    %479 = vmatpush2.msra.mxu0 0.0
    %480 = vmatprep.subr.mxu0 0.0
    %481 = vmatpush2.msra.mxu0 0.0
    %482 = vmatprep.subr.mxu0 0.0
    %483 = vmatpush2.msra.mxu0 0.0
    %484 = vmatprep.subr.mxu0 0.0
    %485 = vmatpush2.msra.mxu0 0.0
    %486 = vmatprep.subr.mxu0 0.0
    %487 = vmatpush2.msra.mxu0 0.0
    %488 = vmatprep.subr.mxu0 0.0
    %489 = vmatpush2.msra.mxu0 0.0
    %490 = vmatprep.subr.mxu0 0.0
    %491 = vmatpush2.msra.mxu0 0.0
    %492 = vmatprep.subr.mxu0 0.0
    %493 = vmatpush2.msra.mxu0 0.0
    %494 = vmatprep.subr.mxu0 0.0
    %495 = vmatpush2.msra.mxu0 0.0
    %496 = vmatprep.mubr.f32.mxu0 0.0
    %497 = vmatmul.mubr.f32.gmra.mxu0 %v408
    %v498 = vpop.f32.mrf.mxu0
    %v499 = vadd.f32 %v430, %v498
    %v500 = vpop.f32.mrf.mxu0
    %501 = vdwg.mxu0
    %v502 = vxor.u32 %v499, 2147483648
    %v503 = vmul.f32 %v502, 1.442695
    %v504 = vpow.pop %v503
    %v505 = vadd.f32 %v504, 1.0
    %v506 = vrcp.pop %v505
    %v507 = vmul.f32 1.0, %v506
    %508 = vst [vmem:[#allocation13] sm:$0xff] %v507
    // Predicated region
    $region66: #{tpu_custom_call.1} parent=1 // pred_check
      _
    $region67: #{tpu_custom_call.1} parent=1 // pred_check_branch
      %510 = sbr.rel (0) target = $region69
    $region68: #{tpu_custom_call.1} parent=1 // pred_region
      %s512 = ssub.s32 128, 128
      %513 = vsyncadd [#allocation4], %s512
      %s515 = sshll.u32 [#allocation13], 4
      %s516 = int_to_ptr.vmem [resolvable:$true] %s515
      %518 = dma.vmem_to_hbm [thread:$0]  %s516, 128, %s10, [#allocation4]
    $region69: #{tpu_custom_call.1} parent=1 // pred_fallthru
      _
    // Predicated region
    $region70: #{tpu_custom_call.1} parent=1 // pred_check
      _
    $region71: #{tpu_custom_call.1} parent=1 // pred_check_branch
      %520 = sbr.rel (0) target = $region73
    $region72: #{tpu_custom_call.1} parent=1 // pred_region
      %s522 = ssub.s32 128, 128
      %523 = vsyncadd [#allocation15], %s522
      %s525 = sshll.u32 [#allocation14], 4
      %s526 = int_to_ptr.vmem [resolvable:$true] %s525
      %528 = dma.vmem_to_hbm [thread:$0]  %s526, 128, %s11, [#allocation15]
    $region73: #{tpu_custom_call.1} parent=1 // pred_fallthru
      _
    // Predicated region
    $region74: #{tpu_custom_call.1} parent=1 // pred_check
      _
    $region75: #{tpu_custom_call.1} parent=1 // pred_check_branch
      %530 = sbr.rel (0) target = $region77
    $region76: #{tpu_custom_call.1} parent=1 // pred_region
      %531 = dma.done [#allocation4], 128
    $region77: #{tpu_custom_call.1} parent=1 // pred_fallthru
      _
    // Predicated region
    $region78: #{tpu_custom_call.1} parent=1 // pred_check
      _
    $region79: #{tpu_custom_call.1} parent=1 // pred_check_branch
      %533 = sbr.rel (0) target = $region81
    $region80: #{tpu_custom_call.1} parent=1 // pred_region
      %534 = dma.done [#allocation15], 128
    $region81: #{tpu_custom_call.1} parent=1 // pred_fallthru
      _
    %535 = vsyncpa [#allocation3], 1
    %536 = vsyncpa [#allocation6], 1
    %537 = vsyncpa [#allocation9], 1
    %538 = vsyncpa [#allocation12], 1
    %539 = vsyncpa [#allocation4], 1
    %540 = vsyncpa [#allocation15], 1

</llo_original>
